<compile_context>
chip_gen: v6e
topology: v6e:2x2x1
jax: 0.10.0
libtpu: 0.0.40
codegen_flags: <defaults>
</compile_context>

<pallas_src>
import functools

import jax
import jax.numpy as jnp
import numpy as np
from jax import lax
from jax.experimental import pallas as pl
from jax.experimental.pallas import tpu as pltpu


def lstm_encoder_kernel(x_ref, wih_ref, b_ref, whh_ref, out_ref, g_ref,
                        *, seq_len, b_pad, b_real, hidden, fuse_dirs):
    # x_ref   : (T*Bp, E)   f32  time-major, batch padded to Bp rows
    # wih_ref : (E, 8H)     f32  [fwd 4H | bwd 4H], gate order [i, f, o, g]
    # b_ref   : (1, 8H)     f32  fused b_ih + b_hh, same column layout
    # whh_ref : (2H, 8H)    f32  block-diagonal [[Whh_f, 0], [0, Whh_b]]
    # out_ref : (1, 2H)     f32  [mean fwd H | mean bwd H]
    # g_ref   : (T*Bp, 8H)  f32  VMEM scratch: precomputed input projection
    T, B, H = seq_len, b_pad, hidden
    G = 4 * H

    # ---- Phase 1: single fused input projection for both directions --------
    g_ref[...] = (jnp.dot(x_ref[...], wih_ref[...],
                          preferred_element_type=jnp.float32)
                  + b_ref[...])                                  # (T*Bp, 8H)

    def activate(gates):
        # gates: (Bp, 4H), columns ordered [i, f, o, g] -> 2 EUP pushes.
        sig = jax.nn.sigmoid(gates[:, 0:3 * H])
        g_t = jnp.tanh(gates[:, 3 * H:4 * H])
        return sig[:, 0:H], sig[:, H:2 * H], sig[:, 2 * H:3 * H], g_t

    def cell_update(i_g, f_g, o_g, g_t, c):
        c_new = f_g * c + i_g * g_t
        h_new = o_g * jnp.tanh(c_new)
        return h_new, c_new

    # ---- Phase 2: recurrence (the serial critical path) ---------------------
    if fuse_dirs:
        # v6e / v7x: one 256-wide MXU push per step via the block-diagonal Whh.
        whh_bd = whh_ref[...]                                    # (2H, 8H)

        def step(t, carry):
            h, c, acc = carry                                    # (Bp, 2H) each
            off_f = pl.multiple_of(t * B, B)
            off_b = pl.multiple_of((T - 1 - t) * B, B)
            row_f = g_ref[pl.ds(off_f, B), :]                    # (Bp, 8H)
            row_b = g_ref[pl.ds(off_b, B), :]
            hh = jnp.dot(h, whh_bd, preferred_element_type=jnp.float32)
            gates_f = row_f[:, 0:G] + hh[:, 0:G]
            gates_b = row_b[:, G:2 * G] + hh[:, G:2 * G]
            i_f, f_f, o_f, g_f = activate(gates_f)
            i_b, f_b, o_b, g_b = activate(gates_b)
            h_f, c_f = cell_update(i_f, f_f, o_f, g_f, c[:, 0:H])
            h_b, c_b = cell_update(i_b, f_b, o_b, g_b, c[:, H:2 * H])
            h_new = jnp.concatenate([h_f, h_b], axis=1)
            c_new = jnp.concatenate([c_f, c_b], axis=1)
            return h_new, c_new, acc + h_new

        zero = jnp.zeros((B, 2 * H), jnp.float32)
        # Full unroll is fine at tiny T; cap (unroll=4/8) for realistic T.
        _, _, acc = lax.fori_loop(0, T, step, (zero, zero, zero), unroll=True)
    else:
        # v5e: MXU sub-units are 128 wide, so two independent 128-wide pushes
        # already overlap; keep per-direction matmuls separate but interleaved.
        whh_f = whh_ref[0:H, 0:G]                                # (H, 4H)
        whh_b = whh_ref[H:2 * H, G:2 * G]

        def step(t, carry):
            h_f, c_f, acc_f, h_b, c_b, acc_b = carry
            off_f = pl.multiple_of(t * B, B)
            off_b = pl.multiple_of((T - 1 - t) * B, B)
            row_f = g_ref[pl.ds(off_f, B), :]
            row_b = g_ref[pl.ds(off_b, B), :]
            gates_f = row_f[:, 0:G] + jnp.dot(
                h_f, whh_f, preferred_element_type=jnp.float32)
            gates_b = row_b[:, G:2 * G] + jnp.dot(
                h_b, whh_b, preferred_element_type=jnp.float32)
            i_f, f_f, o_f, g_f = activate(gates_f)
            i_b, f_b, o_b, g_b = activate(gates_b)
            h_f, c_f = cell_update(i_f, f_f, o_f, g_f, c_f)
            h_b, c_b = cell_update(i_b, f_b, o_b, g_b, c_b)
            return (h_f, c_f, acc_f + h_f, h_b, c_b, acc_b + h_b)

        zero = jnp.zeros((B, H), jnp.float32)
        _, _, acc_f, _, _, acc_b = lax.fori_loop(
            0, T, step, (zero, zero, zero, zero, zero, zero), unroll=True)
        acc = jnp.concatenate([acc_f, acc_b], axis=1)            # (Bp, 2H)

    # ---- Phase 3: mask padded rows, one batch reduction, one store ----------
    row_mask = (lax.broadcasted_iota(jnp.int32, (B, 1), 0)
                < b_real).astype(jnp.float32)                    # (Bp, 1)
    inv = jnp.float32(1.0 / (T * b_real))
    out_ref[...] = jnp.sum(acc * row_mask, axis=0, keepdims=True) * inv


def _reorder_gate_rows(w):
    """PyTorch gate row order [i, f, g, o] -> [i, f, o, g] on a (4H, ...) tensor."""
    H = w.shape[0] // 4
    return jnp.concatenate(
        [w[0:H], w[H:2 * H], w[3 * H:4 * H], w[2 * H:3 * H]], axis=0)


def _fuse_directions_for_device():
    """Block-diagonal (256-wide) per-step fusion on v6e/v7x; separate on v5."""
    try:
        kind = jax.devices()[0].device_kind.lower()
    except Exception:
        return True
    return "v5" not in kind


def lstm_encoder(x, params):
    """x: (T, B, E) float32, params: raw PyTorch-layout LSTM weights -> (2H,)."""
    T, B, E = x.shape
    H = params["w_hh_f"].shape[1]
    G = 4 * H

    # -- Param prep: gate reorder [i,f,g,o]->[i,f,o,g], fuse the directions ---
    wih_f = _reorder_gate_rows(params["w_ih_f"]).T               # (E, 4H)
    wih_b = _reorder_gate_rows(params["w_ih_b"]).T
    wih_cat = jnp.concatenate([wih_f, wih_b], axis=1)            # (E, 8H)

    b_f = _reorder_gate_rows(params["b_ih_f"] + params["b_hh_f"])
    b_b = _reorder_gate_rows(params["b_ih_b"] + params["b_hh_b"])
    b_cat = jnp.concatenate([b_f, b_b])[None, :]                 # (1, 8H)

    whh_f = _reorder_gate_rows(params["w_hh_f"]).T               # (H, 4H)
    whh_b = _reorder_gate_rows(params["w_hh_b"]).T
    z = jnp.zeros((H, G), jnp.float32)
    whh_bd = jnp.concatenate(
        [jnp.concatenate([whh_f, z], axis=1),
         jnp.concatenate([z, whh_b], axis=1)], axis=0)           # (2H, 8H)

    # -- Pad batch to a full f32 sublane tile, flatten time into the row axis -
    b_pad = max(8, ((B + 7) // 8) * 8)
    x_pad = jnp.pad(x, ((0, 0), (0, b_pad - B), (0, 0)))
    x2 = x_pad.reshape(T * b_pad, E)

    fuse_dirs = _fuse_directions_for_device()
    kernel = functools.partial(
        lstm_encoder_kernel, seq_len=T, b_pad=b_pad, b_real=B, hidden=H,
        fuse_dirs=fuse_dirs)

    # VMEM budget sized to the actual (f32) buffers, with generous headroom.
    n_elems = (x2.size + wih_cat.size + b_cat.size + whh_bd.size
               + 2 * H + T * b_pad * 2 * G)
    vmem_limit = int(min(64 << 20, max(8 << 20, 8 * n_elems + (1 << 20))))

    # NOTE: for production-scale T, replace the O(T) VMEM residency with
    # T-chunked streaming (grid over T-chunks / pltpu.emit_pipeline with
    # persistent h/c/acc scratch) — mandatory on v7x's 64 MiB VMEM.
    out = pl.pallas_call(
        kernel,
        out_shape=jax.ShapeDtypeStruct((1, 2 * H), jnp.float32),
        in_specs=[pl.BlockSpec(memory_space=pltpu.MemorySpace.VMEM)] * 4,
        out_specs=pl.BlockSpec(memory_space=pltpu.MemorySpace.VMEM),
        scratch_shapes=[
            pltpu.VMEM((T * b_pad, 2 * G), jnp.float32),   # fused input proj
        ],
        compiler_params=pltpu.CompilerParams(vmem_limit_bytes=vmem_limit),
    )(x2, wih_cat, b_cat, whh_bd)
    return out[0]


def make_params(key, embedding_size, hidden_size):
    """Deterministic params, raw PyTorch LSTM shapes: W_ih (4H,E), W_hh (4H,H), b (4H,)."""
    H, E = hidden_size, embedding_size
    k = 1.0 / np.sqrt(H)
    keys = jax.random.split(key, 8)

    def u(k_, shape):
        return jax.random.uniform(k_, shape, jnp.float32, minval=-k, maxval=k)

    return {
        "w_ih_f": u(keys[0], (4 * H, E)), "w_hh_f": u(keys[1], (4 * H, H)),
        "b_ih_f": u(keys[2], (4 * H,)),   "b_hh_f": u(keys[3], (4 * H,)),
        "w_ih_b": u(keys[4], (4 * H, E)), "w_hh_b": u(keys[5], (4 * H, H)),
        "b_ih_b": u(keys[6], (4 * H,)),   "b_hh_b": u(keys[7], (4 * H,)),
    }


def reference_forward(x, params):
    """Pure-JAX reference using the raw PyTorch [i,f,g,o] layout (validates the
    kernel's gate permutation and direction fusion)."""
    T, B, E = x.shape
    H = params["w_hh_f"].shape[1]

    def run(w_ih, w_hh, b_ih, b_hh, xs):
        wih = w_ih.T                                    # (E, 4H)
        whh = w_hh.T                                    # (H, 4H)
        b = (b_ih + b_hh)[None, :]                      # (1, 4H)

        def step(carry, x_t):
            h, c = carry
            gates = x_t @ wih + h @ whh + b
            i_g = jax.nn.sigmoid(gates[:, 0 * H:1 * H])
            f_g = jax.nn.sigmoid(gates[:, 1 * H:2 * H])
            g_g = jnp.tanh(gates[:, 2 * H:3 * H])
            o_g = jax.nn.sigmoid(gates[:, 3 * H:4 * H])
            c = f_g * c + i_g * g_g
            h = o_g * jnp.tanh(c)
            return (h, c), h

        init = (jnp.zeros((B, H), jnp.float32), jnp.zeros((B, H), jnp.float32))
        _, hs = lax.scan(step, init, xs)
        return hs                                       # (T, B, H)

    hs_f = run(params["w_ih_f"], params["w_hh_f"],
               params["b_ih_f"], params["b_hh_f"], x)
    hs_b = run(params["w_ih_b"], params["w_hh_b"],
               params["b_ih_b"], params["b_hh_b"], x[::-1])[::-1]
    rep = jnp.concatenate([hs_f, hs_b], axis=-1)        # (T, B, 2H)
    return jnp.mean(jnp.mean(rep, axis=1), axis=0)      # (2H,)


if __name__ == "__main__":
    T, B, E, H = 8, 2, 16, 32
    key = jax.random.PRNGKey(0)
    k_x, k_p = jax.random.split(key)
    x = jax.random.normal(k_x, (T, B, E), jnp.float32)
    params = make_params(k_p, E, H)

    out = lstm_encoder(x, params)
    out = jax.block_until_ready(out)

    ref = jax.block_until_ready(reference_forward(x, params))
    np.testing.assert_allclose(np.asarray(out), np.asarray(ref),
                               rtol=1e-5, atol=1e-5)
    assert out.shape == (2 * H,)
    print("KERNEL_OK")
</pallas_src>

<mosaic_0001>
module attributes {stable_mosaic.version = 11 : i64} {
  func.func @lstm_encoder_kernel(%arg0: memref<64x16xf32, #tpu.memory_space<vmem>>, %arg1: memref<16x256xf32, #tpu.memory_space<vmem>>, %arg2: memref<1x256xf32, #tpu.memory_space<vmem>>, %arg3: memref<64x256xf32, #tpu.memory_space<vmem>>, %arg4: memref<1x64xf32, #tpu.memory_space<vmem>>, %arg5: memref<64x256xf32, #tpu.memory_space<vmem>>) attributes {dimension_semantics = [], scalar_prefetch = 0 : i64, scratch_operands = 1 : i64, tpu.core_type = #tpu.core_type<tc>} {
    %c0 = arith.constant 0 : index
    %c0_0 = arith.constant 0 : index
    %0 = vector.load %arg0[%c0, %c0_0] : memref<64x16xf32, #tpu.memory_space<vmem>>, vector<64x16xf32>
    %c0_1 = arith.constant 0 : index
    %c0_2 = arith.constant 0 : index
    %1 = vector.load %arg1[%c0_1, %c0_2] : memref<16x256xf32, #tpu.memory_space<vmem>>, vector<16x256xf32>
    %cst = arith.constant dense<0.000000e+00> : vector<64x256xf32>
    %2 = tpu.matmul %0, %1, %cst {dimension_numbers = #tpu.dot_dimension_numbers<[1], [0], [0], [1], [0, 0, 1, 1], [], []>} : vector<64x16xf32>, vector<16x256xf32>, vector<64x256xf32> -> vector<64x256xf32>
    %c0_3 = arith.constant 0 : index
    %c0_4 = arith.constant 0 : index
    %3 = vector.load %arg2[%c0_3, %c0_4] : memref<1x256xf32, #tpu.memory_space<vmem>>, vector<1x256xf32>
    %4 = vector.broadcast %3 : vector<1x256xf32> to vector<64x256xf32>
    %5 = arith.addf %2, %4 : vector<64x256xf32>
    %c0_5 = arith.constant 0 : index
    %c0_6 = arith.constant 0 : index
    %6 = vector.load %arg5[%c0_5, %c0_6] : memref<64x256xf32, #tpu.memory_space<vmem>>, vector<64x256xf32>
    tpu.vector_store %arg5[%c0_5, %c0_6], %5 {strides = array<i32>} : memref<64x256xf32, #tpu.memory_space<vmem>>, vector<64x256xf32>,
    %c0_7 = arith.constant 0 : index
    %c0_8 = arith.constant 0 : index
    %7 = vector.load %arg3[%c0_7, %c0_8] : memref<64x256xf32, #tpu.memory_space<vmem>>, vector<64x256xf32>
    %cst_9 = arith.constant 0.000000e+00 : f32
    %8 = vector.broadcast %cst_9 : f32 to vector<8x64xf32>
    %c0_i32 = arith.constant 0 : i32
    %c8_i32 = arith.constant 8 : i32
    %9 = arith.muli %c0_i32, %c8_i32 : i32
    %10 = tpu.assume_multiple %9, 8 : i32
    %c7_i32 = arith.constant 7 : i32
    %11 = arith.subi %c7_i32, %c0_i32 : i32
    %c8_i32_10 = arith.constant 8 : i32
    %12 = arith.muli %11, %c8_i32_10 : i32
    %13 = tpu.assume_multiple %12, 8 : i32
    %14 = arith.index_cast %10 : i32 to index
    %c0_11 = arith.constant 0 : index
    %15 = vector.load %arg5[%14, %c0_11] : memref<64x256xf32, #tpu.memory_space<vmem>>, vector<8x256xf32>
    %16 = arith.index_cast %13 : i32 to index
    %c0_12 = arith.constant 0 : index
    %17 = vector.load %arg5[%16, %c0_12] : memref<64x256xf32, #tpu.memory_space<vmem>>, vector<8x256xf32>
    %cst_13 = arith.constant dense<0.000000e+00> : vector<8x256xf32>
    %18 = tpu.matmul %8, %7, %cst_13 {dimension_numbers = #tpu.dot_dimension_numbers<[1], [0], [0], [1], [0, 0, 1, 1], [], []>} : vector<8x64xf32>, vector<64x256xf32>, vector<8x256xf32> -> vector<8x256xf32>
    %19 = vector.extract_strided_slice %15 {offsets = [0, 0], sizes = [8, 128], strides = [1, 1]} : vector<8x256xf32> to vector<8x128xf32>
    %20 = vector.extract_strided_slice %18 {offsets = [0, 0], sizes = [8, 128], strides = [1, 1]} : vector<8x256xf32> to vector<8x128xf32>
    %21 = arith.addf %19, %20 : vector<8x128xf32>
    %22 = vector.extract_strided_slice %17 {offsets = [0, 128], sizes = [8, 128], strides = [1, 1]} : vector<8x256xf32> to vector<8x128xf32>
    %23 = vector.extract_strided_slice %18 {offsets = [0, 128], sizes = [8, 128], strides = [1, 1]} : vector<8x256xf32> to vector<8x128xf32>
    %24 = arith.addf %22, %23 : vector<8x128xf32>
    %25 = vector.extract_strided_slice %21 {offsets = [0, 0], sizes = [8, 96], strides = [1, 1]} : vector<8x128xf32> to vector<8x96xf32>
    %26 = arith.negf %25 : vector<8x96xf32>
    %27 = math.exp %26 : vector<8x96xf32>
    %cst_14 = arith.constant 1.000000e+00 : f32
    %28 = vector.broadcast %cst_14 : f32 to vector<8x96xf32>
    %29 = arith.addf %28, %27 : vector<8x96xf32>
    %30 = arith.divf %28, %29 : vector<8x96xf32>
    %31 = vector.extract_strided_slice %21 {offsets = [0, 96], sizes = [8, 32], strides = [1, 1]} : vector<8x128xf32> to vector<8x32xf32>
    %32 = math.tanh %31 : vector<8x32xf32>
    %33 = vector.extract_strided_slice %30 {offsets = [0, 0], sizes = [8, 32], strides = [1, 1]} : vector<8x96xf32> to vector<8x32xf32>
    %34 = vector.extract_strided_slice %30 {offsets = [0, 32], sizes = [8, 32], strides = [1, 1]} : vector<8x96xf32> to vector<8x32xf32>
    %35 = vector.extract_strided_slice %30 {offsets = [0, 64], sizes = [8, 32], strides = [1, 1]} : vector<8x96xf32> to vector<8x32xf32>
    %36 = vector.extract_strided_slice %24 {offsets = [0, 0], sizes = [8, 96], strides = [1, 1]} : vector<8x128xf32> to vector<8x96xf32>
    %37 = arith.negf %36 : vector<8x96xf32>
    %38 = math.exp %37 : vector<8x96xf32>
    %cst_15 = arith.constant 1.000000e+00 : f32
    %39 = vector.broadcast %cst_15 : f32 to vector<8x96xf32>
    %40 = arith.addf %39, %38 : vector<8x96xf32>
    %41 = arith.divf %39, %40 : vector<8x96xf32>
    %42 = vector.extract_strided_slice %24 {offsets = [0, 96], sizes = [8, 32], strides = [1, 1]} : vector<8x128xf32> to vector<8x32xf32>
    %43 = math.tanh %42 : vector<8x32xf32>
    %44 = vector.extract_strided_slice %41 {offsets = [0, 0], sizes = [8, 32], strides = [1, 1]} : vector<8x96xf32> to vector<8x32xf32>
    %45 = vector.extract_strided_slice %41 {offsets = [0, 32], sizes = [8, 32], strides = [1, 1]} : vector<8x96xf32> to vector<8x32xf32>
    %46 = vector.extract_strided_slice %41 {offsets = [0, 64], sizes = [8, 32], strides = [1, 1]} : vector<8x96xf32> to vector<8x32xf32>
    %47 = vector.extract_strided_slice %8 {offsets = [0, 0], sizes = [8, 32], strides = [1, 1]} : vector<8x64xf32> to vector<8x32xf32>
    %48 = arith.mulf %34, %47 : vector<8x32xf32>
    %49 = arith.mulf %33, %32 : vector<8x32xf32>
    %50 = arith.addf %48, %49 : vector<8x32xf32>
    %51 = math.tanh %50 : vector<8x32xf32>
    %52 = arith.mulf %35, %51 : vector<8x32xf32>
    %53 = vector.extract_strided_slice %8 {offsets = [0, 32], sizes = [8, 32], strides = [1, 1]} : vector<8x64xf32> to vector<8x32xf32>
    %54 = arith.mulf %45, %53 : vector<8x32xf32>
    %55 = arith.mulf %44, %43 : vector<8x32xf32>
    %56 = arith.addf %54, %55 : vector<8x32xf32>
    %57 = math.tanh %56 : vector<8x32xf32>
    %58 = arith.mulf %46, %57 : vector<8x32xf32>
    %59 = tpu.concatenate %52, %58 in 1 : vector<8x32xf32>, vector<8x32xf32> -> vector<8x64xf32>
    %60 = tpu.concatenate %50, %56 in 1 : vector<8x32xf32>, vector<8x32xf32> -> vector<8x64xf32>
    %61 = arith.addf %8, %59 : vector<8x64xf32>
    %c1_i32 = arith.constant 1 : i32
    %c8_i32_16 = arith.constant 8 : i32
    %62 = arith.muli %c1_i32, %c8_i32_16 : i32
    %63 = tpu.assume_multiple %62, 8 : i32
    %c7_i32_17 = arith.constant 7 : i32
    %64 = arith.subi %c7_i32_17, %c1_i32 : i32
    %c8_i32_18 = arith.constant 8 : i32
    %65 = arith.muli %64, %c8_i32_18 : i32
    %66 = tpu.assume_multiple %65, 8 : i32
    %67 = arith.index_cast %63 : i32 to index
    %c0_19 = arith.constant 0 : index
    %68 = vector.load %arg5[%67, %c0_19] : memref<64x256xf32, #tpu.memory_space<vmem>>, vector<8x256xf32>
    %69 = arith.index_cast %66 : i32 to index
    %c0_20 = arith.constant 0 : index
    %70 = vector.load %arg5[%69, %c0_20] : memref<64x256xf32, #tpu.memory_space<vmem>>, vector<8x256xf32>
    %cst_21 = arith.constant dense<0.000000e+00> : vector<8x256xf32>
    %71 = tpu.matmul %59, %7, %cst_21 {dimension_numbers = #tpu.dot_dimension_numbers<[1], [0], [0], [1], [0, 0, 1, 1], [], []>} : vector<8x64xf32>, vector<64x256xf32>, vector<8x256xf32> -> vector<8x256xf32>
    %72 = vector.extract_strided_slice %68 {offsets = [0, 0], sizes = [8, 128], strides = [1, 1]} : vector<8x256xf32> to vector<8x128xf32>
    %73 = vector.extract_strided_slice %71 {offsets = [0, 0], sizes = [8, 128], strides = [1, 1]} : vector<8x256xf32> to vector<8x128xf32>
    %74 = arith.addf %72, %73 : vector<8x128xf32>
    %75 = vector.extract_strided_slice %70 {offsets = [0, 128], sizes = [8, 128], strides = [1, 1]} : vector<8x256xf32> to vector<8x128xf32>
    %76 = vector.extract_strided_slice %71 {offsets = [0, 128], sizes = [8, 128], strides = [1, 1]} : vector<8x256xf32> to vector<8x128xf32>
    %77 = arith.addf %75, %76 : vector<8x128xf32>
    %78 = vector.extract_strided_slice %74 {offsets = [0, 0], sizes = [8, 96], strides = [1, 1]} : vector<8x128xf32> to vector<8x96xf32>
    %79 = arith.negf %78 : vector<8x96xf32>
    %80 = math.exp %79 : vector<8x96xf32>
    %cst_22 = arith.constant 1.000000e+00 : f32
    %81 = vector.broadcast %cst_22 : f32 to vector<8x96xf32>
    %82 = arith.addf %81, %80 : vector<8x96xf32>
    %83 = arith.divf %81, %82 : vector<8x96xf32>
    %84 = vector.extract_strided_slice %74 {offsets = [0, 96], sizes = [8, 32], strides = [1, 1]} : vector<8x128xf32> to vector<8x32xf32>
    %85 = math.tanh %84 : vector<8x32xf32>
    %86 = vector.extract_strided_slice %83 {offsets = [0, 0], sizes = [8, 32], strides = [1, 1]} : vector<8x96xf32> to vector<8x32xf32>
    %87 = vector.extract_strided_slice %83 {offsets = [0, 32], sizes = [8, 32], strides = [1, 1]} : vector<8x96xf32> to vector<8x32xf32>
    %88 = vector.extract_strided_slice %83 {offsets = [0, 64], sizes = [8, 32], strides = [1, 1]} : vector<8x96xf32> to vector<8x32xf32>
    %89 = vector.extract_strided_slice %77 {offsets = [0, 0], sizes = [8, 96], strides = [1, 1]} : vector<8x128xf32> to vector<8x96xf32>
    %90 = arith.negf %89 : vector<8x96xf32>
    %91 = math.exp %90 : vector<8x96xf32>
    %cst_23 = arith.constant 1.000000e+00 : f32
    %92 = vector.broadcast %cst_23 : f32 to vector<8x96xf32>
    %93 = arith.addf %92, %91 : vector<8x96xf32>
    %94 = arith.divf %92, %93 : vector<8x96xf32>
    %95 = vector.extract_strided_slice %77 {offsets = [0, 96], sizes = [8, 32], strides = [1, 1]} : vector<8x128xf32> to vector<8x32xf32>
    %96 = math.tanh %95 : vector<8x32xf32>
    %97 = vector.extract_strided_slice %94 {offsets = [0, 0], sizes = [8, 32], strides = [1, 1]} : vector<8x96xf32> to vector<8x32xf32>
    %98 = vector.extract_strided_slice %94 {offsets = [0, 32], sizes = [8, 32], strides = [1, 1]} : vector<8x96xf32> to vector<8x32xf32>
    %99 = vector.extract_strided_slice %94 {offsets = [0, 64], sizes = [8, 32], strides = [1, 1]} : vector<8x96xf32> to vector<8x32xf32>
    %100 = vector.extract_strided_slice %60 {offsets = [0, 0], sizes = [8, 32], strides = [1, 1]} : vector<8x64xf32> to vector<8x32xf32>
    %101 = arith.mulf %87, %100 : vector<8x32xf32>
    %102 = arith.mulf %86, %85 : vector<8x32xf32>
    %103 = arith.addf %101, %102 : vector<8x32xf32>
    %104 = math.tanh %103 : vector<8x32xf32>
    %105 = arith.mulf %88, %104 : vector<8x32xf32>
    %106 = vector.extract_strided_slice %60 {offsets = [0, 32], sizes = [8, 32], strides = [1, 1]} : vector<8x64xf32> to vector<8x32xf32>
    %107 = arith.mulf %98, %106 : vector<8x32xf32>
    %108 = arith.mulf %97, %96 : vector<8x32xf32>
    %109 = arith.addf %107, %108 : vector<8x32xf32>
    %110 = math.tanh %109 : vector<8x32xf32>
    %111 = arith.mulf %99, %110 : vector<8x32xf32>
    %112 = tpu.concatenate %105, %111 in 1 : vector<8x32xf32>, vector<8x32xf32> -> vector<8x64xf32>
    %113 = tpu.concatenate %103, %109 in 1 : vector<8x32xf32>, vector<8x32xf32> -> vector<8x64xf32>
    %114 = arith.addf %61, %112 : vector<8x64xf32>
    %c2_i32 = arith.constant 2 : i32
    %c8_i32_24 = arith.constant 8 : i32
    %115 = arith.muli %c2_i32, %c8_i32_24 : i32
    %116 = tpu.assume_multiple %115, 8 : i32
    %c7_i32_25 = arith.constant 7 : i32
    %117 = arith.subi %c7_i32_25, %c2_i32 : i32
    %c8_i32_26 = arith.constant 8 : i32
    %118 = arith.muli %117, %c8_i32_26 : i32
    %119 = tpu.assume_multiple %118, 8 : i32
    %120 = arith.index_cast %116 : i32 to index
    %c0_27 = arith.constant 0 : index
    %121 = vector.load %arg5[%120, %c0_27] : memref<64x256xf32, #tpu.memory_space<vmem>>, vector<8x256xf32>
    %122 = arith.index_cast %119 : i32 to index
    %c0_28 = arith.constant 0 : index
    %123 = vector.load %arg5[%122, %c0_28] : memref<64x256xf32, #tpu.memory_space<vmem>>, vector<8x256xf32>
    %cst_29 = arith.constant dense<0.000000e+00> : vector<8x256xf32>
    %124 = tpu.matmul %112, %7, %cst_29 {dimension_numbers = #tpu.dot_dimension_numbers<[1], [0], [0], [1], [0, 0, 1, 1], [], []>} : vector<8x64xf32>, vector<64x256xf32>, vector<8x256xf32> -> vector<8x256xf32>
    %125 = vector.extract_strided_slice %121 {offsets = [0, 0], sizes = [8, 128], strides = [1, 1]} : vector<8x256xf32> to vector<8x128xf32>
    %126 = vector.extract_strided_slice %124 {offsets = [0, 0], sizes = [8, 128], strides = [1, 1]} : vector<8x256xf32> to vector<8x128xf32>
    %127 = arith.addf %125, %126 : vector<8x128xf32>
    %128 = vector.extract_strided_slice %123 {offsets = [0, 128], sizes = [8, 128], strides = [1, 1]} : vector<8x256xf32> to vector<8x128xf32>
    %129 = vector.extract_strided_slice %124 {offsets = [0, 128], sizes = [8, 128], strides = [1, 1]} : vector<8x256xf32> to vector<8x128xf32>
    %130 = arith.addf %128, %129 : vector<8x128xf32>
    %131 = vector.extract_strided_slice %127 {offsets = [0, 0], sizes = [8, 96], strides = [1, 1]} : vector<8x128xf32> to vector<8x96xf32>
    %132 = arith.negf %131 : vector<8x96xf32>
    %133 = math.exp %132 : vector<8x96xf32>
    %cst_30 = arith.constant 1.000000e+00 : f32
    %134 = vector.broadcast %cst_30 : f32 to vector<8x96xf32>
    %135 = arith.addf %134, %133 : vector<8x96xf32>
    %136 = arith.divf %134, %135 : vector<8x96xf32>
    %137 = vector.extract_strided_slice %127 {offsets = [0, 96], sizes = [8, 32], strides = [1, 1]} : vector<8x128xf32> to vector<8x32xf32>
    %138 = math.tanh %137 : vector<8x32xf32>
    %139 = vector.extract_strided_slice %136 {offsets = [0, 0], sizes = [8, 32], strides = [1, 1]} : vector<8x96xf32> to vector<8x32xf32>
    %140 = vector.extract_strided_slice %136 {offsets = [0, 32], sizes = [8, 32], strides = [1, 1]} : vector<8x96xf32> to vector<8x32xf32>
    %141 = vector.extract_strided_slice %136 {offsets = [0, 64], sizes = [8, 32], strides = [1, 1]} : vector<8x96xf32> to vector<8x32xf32>
    %142 = vector.extract_strided_slice %130 {offsets = [0, 0], sizes = [8, 96], strides = [1, 1]} : vector<8x128xf32> to vector<8x96xf32>
    %143 = arith.negf %142 : vector<8x96xf32>
    %144 = math.exp %143 : vector<8x96xf32>
    %cst_31 = arith.constant 1.000000e+00 : f32
    %145 = vector.broadcast %cst_31 : f32 to vector<8x96xf32>
    %146 = arith.addf %145, %144 : vector<8x96xf32>
    %147 = arith.divf %145, %146 : vector<8x96xf32>
    %148 = vector.extract_strided_slice %130 {offsets = [0, 96], sizes = [8, 32], strides = [1, 1]} : vector<8x128xf32> to vector<8x32xf32>
    %149 = math.tanh %148 : vector<8x32xf32>
    %150 = vector.extract_strided_slice %147 {offsets = [0, 0], sizes = [8, 32], strides = [1, 1]} : vector<8x96xf32> to vector<8x32xf32>
    %151 = vector.extract_strided_slice %147 {offsets = [0, 32], sizes = [8, 32], strides = [1, 1]} : vector<8x96xf32> to vector<8x32xf32>
    %152 = vector.extract_strided_slice %147 {offsets = [0, 64], sizes = [8, 32], strides = [1, 1]} : vector<8x96xf32> to vector<8x32xf32>
    %153 = vector.extract_strided_slice %113 {offsets = [0, 0], sizes = [8, 32], strides = [1, 1]} : vector<8x64xf32> to vector<8x32xf32>
    %154 = arith.mulf %140, %153 : vector<8x32xf32>
    %155 = arith.mulf %139, %138 : vector<8x32xf32>
    %156 = arith.addf %154, %155 : vector<8x32xf32>
    %157 = math.tanh %156 : vector<8x32xf32>
    %158 = arith.mulf %141, %157 : vector<8x32xf32>
    %159 = vector.extract_strided_slice %113 {offsets = [0, 32], sizes = [8, 32], strides = [1, 1]} : vector<8x64xf32> to vector<8x32xf32>
    %160 = arith.mulf %151, %159 : vector<8x32xf32>
    %161 = arith.mulf %150, %149 : vector<8x32xf32>
    %162 = arith.addf %160, %161 : vector<8x32xf32>
    %163 = math.tanh %162 : vector<8x32xf32>
    %164 = arith.mulf %152, %163 : vector<8x32xf32>
    %165 = tpu.concatenate %158, %164 in 1 : vector<8x32xf32>, vector<8x32xf32> -> vector<8x64xf32>
    %166 = tpu.concatenate %156, %162 in 1 : vector<8x32xf32>, vector<8x32xf32> -> vector<8x64xf32>
    %167 = arith.addf %114, %165 : vector<8x64xf32>
    %c3_i32 = arith.constant 3 : i32
    %c8_i32_32 = arith.constant 8 : i32
    %168 = arith.muli %c3_i32, %c8_i32_32 : i32
    %169 = tpu.assume_multiple %168, 8 : i32
    %c7_i32_33 = arith.constant 7 : i32
    %170 = arith.subi %c7_i32_33, %c3_i32 : i32
    %c8_i32_34 = arith.constant 8 : i32
    %171 = arith.muli %170, %c8_i32_34 : i32
    %172 = tpu.assume_multiple %171, 8 : i32
    %173 = arith.index_cast %169 : i32 to index
    %c0_35 = arith.constant 0 : index
    %174 = vector.load %arg5[%173, %c0_35] : memref<64x256xf32, #tpu.memory_space<vmem>>, vector<8x256xf32>
    %175 = arith.index_cast %172 : i32 to index
    %c0_36 = arith.constant 0 : index
    %176 = vector.load %arg5[%175, %c0_36] : memref<64x256xf32, #tpu.memory_space<vmem>>, vector<8x256xf32>
    %cst_37 = arith.constant dense<0.000000e+00> : vector<8x256xf32>
    %177 = tpu.matmul %165, %7, %cst_37 {dimension_numbers = #tpu.dot_dimension_numbers<[1], [0], [0], [1], [0, 0, 1, 1], [], []>} : vector<8x64xf32>, vector<64x256xf32>, vector<8x256xf32> -> vector<8x256xf32>
    %178 = vector.extract_strided_slice %174 {offsets = [0, 0], sizes = [8, 128], strides = [1, 1]} : vector<8x256xf32> to vector<8x128xf32>
    %179 = vector.extract_strided_slice %177 {offsets = [0, 0], sizes = [8, 128], strides = [1, 1]} : vector<8x256xf32> to vector<8x128xf32>
    %180 = arith.addf %178, %179 : vector<8x128xf32>
    %181 = vector.extract_strided_slice %176 {offsets = [0, 128], sizes = [8, 128], strides = [1, 1]} : vector<8x256xf32> to vector<8x128xf32>
    %182 = vector.extract_strided_slice %177 {offsets = [0, 128], sizes = [8, 128], strides = [1, 1]} : vector<8x256xf32> to vector<8x128xf32>
    %183 = arith.addf %181, %182 : vector<8x128xf32>
    %184 = vector.extract_strided_slice %180 {offsets = [0, 0], sizes = [8, 96], strides = [1, 1]} : vector<8x128xf32> to vector<8x96xf32>
    %185 = arith.negf %184 : vector<8x96xf32>
    %186 = math.exp %185 : vector<8x96xf32>
    %cst_38 = arith.constant 1.000000e+00 : f32
    %187 = vector.broadcast %cst_38 : f32 to vector<8x96xf32>
    %188 = arith.addf %187, %186 : vector<8x96xf32>
    %189 = arith.divf %187, %188 : vector<8x96xf32>
    %190 = vector.extract_strided_slice %180 {offsets = [0, 96], sizes = [8, 32], strides = [1, 1]} : vector<8x128xf32> to vector<8x32xf32>
    %191 = math.tanh %190 : vector<8x32xf32>
    %192 = vector.extract_strided_slice %189 {offsets = [0, 0], sizes = [8, 32], strides = [1, 1]} : vector<8x96xf32> to vector<8x32xf32>
    %193 = vector.extract_strided_slice %189 {offsets = [0, 32], sizes = [8, 32], strides = [1, 1]} : vector<8x96xf32> to vector<8x32xf32>
    %194 = vector.extract_strided_slice %189 {offsets = [0, 64], sizes = [8, 32], strides = [1, 1]} : vector<8x96xf32> to vector<8x32xf32>
    %195 = vector.extract_strided_slice %183 {offsets = [0, 0], sizes = [8, 96], strides = [1, 1]} : vector<8x128xf32> to vector<8x96xf32>
    %196 = arith.negf %195 : vector<8x96xf32>
    %197 = math.exp %196 : vector<8x96xf32>
    %cst_39 = arith.constant 1.000000e+00 : f32
    %198 = vector.broadcast %cst_39 : f32 to vector<8x96xf32>
    %199 = arith.addf %198, %197 : vector<8x96xf32>
    %200 = arith.divf %198, %199 : vector<8x96xf32>
    %201 = vector.extract_strided_slice %183 {offsets = [0, 96], sizes = [8, 32], strides = [1, 1]} : vector<8x128xf32> to vector<8x32xf32>
    %202 = math.tanh %201 : vector<8x32xf32>
    %203 = vector.extract_strided_slice %200 {offsets = [0, 0], sizes = [8, 32], strides = [1, 1]} : vector<8x96xf32> to vector<8x32xf32>
    %204 = vector.extract_strided_slice %200 {offsets = [0, 32], sizes = [8, 32], strides = [1, 1]} : vector<8x96xf32> to vector<8x32xf32>
    %205 = vector.extract_strided_slice %200 {offsets = [0, 64], sizes = [8, 32], strides = [1, 1]} : vector<8x96xf32> to vector<8x32xf32>
    %206 = vector.extract_strided_slice %166 {offsets = [0, 0], sizes = [8, 32], strides = [1, 1]} : vector<8x64xf32> to vector<8x32xf32>
    %207 = arith.mulf %193, %206 : vector<8x32xf32>
    %208 = arith.mulf %192, %191 : vector<8x32xf32>
    %209 = arith.addf %207, %208 : vector<8x32xf32>
    %210 = math.tanh %209 : vector<8x32xf32>
    %211 = arith.mulf %194, %210 : vector<8x32xf32>
    %212 = vector.extract_strided_slice %166 {offsets = [0, 32], sizes = [8, 32], strides = [1, 1]} : vector<8x64xf32> to vector<8x32xf32>
    %213 = arith.mulf %204, %212 : vector<8x32xf32>
    %214 = arith.mulf %203, %202 : vector<8x32xf32>
    %215 = arith.addf %213, %214 : vector<8x32xf32>
    %216 = math.tanh %215 : vector<8x32xf32>
    %217 = arith.mulf %205, %216 : vector<8x32xf32>
    %218 = tpu.concatenate %211, %217 in 1 : vector<8x32xf32>, vector<8x32xf32> -> vector<8x64xf32>
    %219 = tpu.concatenate %209, %215 in 1 : vector<8x32xf32>, vector<8x32xf32> -> vector<8x64xf32>
    %220 = arith.addf %167, %218 : vector<8x64xf32>
    %c4_i32 = arith.constant 4 : i32
    %c8_i32_40 = arith.constant 8 : i32
    %221 = arith.muli %c4_i32, %c8_i32_40 : i32
    %222 = tpu.assume_multiple %221, 8 : i32
    %c7_i32_41 = arith.constant 7 : i32
    %223 = arith.subi %c7_i32_41, %c4_i32 : i32
    %c8_i32_42 = arith.constant 8 : i32
    %224 = arith.muli %223, %c8_i32_42 : i32
    %225 = tpu.assume_multiple %224, 8 : i32
    %226 = arith.index_cast %222 : i32 to index
    %c0_43 = arith.constant 0 : index
    %227 = vector.load %arg5[%226, %c0_43] : memref<64x256xf32, #tpu.memory_space<vmem>>, vector<8x256xf32>
    %228 = arith.index_cast %225 : i32 to index
    %c0_44 = arith.constant 0 : index
    %229 = vector.load %arg5[%228, %c0_44] : memref<64x256xf32, #tpu.memory_space<vmem>>, vector<8x256xf32>
    %cst_45 = arith.constant dense<0.000000e+00> : vector<8x256xf32>
    %230 = tpu.matmul %218, %7, %cst_45 {dimension_numbers = #tpu.dot_dimension_numbers<[1], [0], [0], [1], [0, 0, 1, 1], [], []>} : vector<8x64xf32>, vector<64x256xf32>, vector<8x256xf32> -> vector<8x256xf32>
    %231 = vector.extract_strided_slice %227 {offsets = [0, 0], sizes = [8, 128], strides = [1, 1]} : vector<8x256xf32> to vector<8x128xf32>
    %232 = vector.extract_strided_slice %230 {offsets = [0, 0], sizes = [8, 128], strides = [1, 1]} : vector<8x256xf32> to vector<8x128xf32>
    %233 = arith.addf %231, %232 : vector<8x128xf32>
    %234 = vector.extract_strided_slice %229 {offsets = [0, 128], sizes = [8, 128], strides = [1, 1]} : vector<8x256xf32> to vector<8x128xf32>
    %235 = vector.extract_strided_slice %230 {offsets = [0, 128], sizes = [8, 128], strides = [1, 1]} : vector<8x256xf32> to vector<8x128xf32>
    %236 = arith.addf %234, %235 : vector<8x128xf32>
    %237 = vector.extract_strided_slice %233 {offsets = [0, 0], sizes = [8, 96], strides = [1, 1]} : vector<8x128xf32> to vector<8x96xf32>
    %238 = arith.negf %237 : vector<8x96xf32>
    %239 = math.exp %238 : vector<8x96xf32>
    %cst_46 = arith.constant 1.000000e+00 : f32
    %240 = vector.broadcast %cst_46 : f32 to vector<8x96xf32>
    %241 = arith.addf %240, %239 : vector<8x96xf32>
    %242 = arith.divf %240, %241 : vector<8x96xf32>
    %243 = vector.extract_strided_slice %233 {offsets = [0, 96], sizes = [8, 32], strides = [1, 1]} : vector<8x128xf32> to vector<8x32xf32>
    %244 = math.tanh %243 : vector<8x32xf32>
    %245 = vector.extract_strided_slice %242 {offsets = [0, 0], sizes = [8, 32], strides = [1, 1]} : vector<8x96xf32> to vector<8x32xf32>
    %246 = vector.extract_strided_slice %242 {offsets = [0, 32], sizes = [8, 32], strides = [1, 1]} : vector<8x96xf32> to vector<8x32xf32>
    %247 = vector.extract_strided_slice %242 {offsets = [0, 64], sizes = [8, 32], strides = [1, 1]} : vector<8x96xf32> to vector<8x32xf32>
    %248 = vector.extract_strided_slice %236 {offsets = [0, 0], sizes = [8, 96], strides = [1, 1]} : vector<8x128xf32> to vector<8x96xf32>
    %249 = arith.negf %248 : vector<8x96xf32>
    %250 = math.exp %249 : vector<8x96xf32>
    %cst_47 = arith.constant 1.000000e+00 : f32
    %251 = vector.broadcast %cst_47 : f32 to vector<8x96xf32>
    %252 = arith.addf %251, %250 : vector<8x96xf32>
    %253 = arith.divf %251, %252 : vector<8x96xf32>
    %254 = vector.extract_strided_slice %236 {offsets = [0, 96], sizes = [8, 32], strides = [1, 1]} : vector<8x128xf32> to vector<8x32xf32>
    %255 = math.tanh %254 : vector<8x32xf32>
    %256 = vector.extract_strided_slice %253 {offsets = [0, 0], sizes = [8, 32], strides = [1, 1]} : vector<8x96xf32> to vector<8x32xf32>
    %257 = vector.extract_strided_slice %253 {offsets = [0, 32], sizes = [8, 32], strides = [1, 1]} : vector<8x96xf32> to vector<8x32xf32>
    %258 = vector.extract_strided_slice %253 {offsets = [0, 64], sizes = [8, 32], strides = [1, 1]} : vector<8x96xf32> to vector<8x32xf32>
    %259 = vector.extract_strided_slice %219 {offsets = [0, 0], sizes = [8, 32], strides = [1, 1]} : vector<8x64xf32> to vector<8x32xf32>
    %260 = arith.mulf %246, %259 : vector<8x32xf32>
    %261 = arith.mulf %245, %244 : vector<8x32xf32>
    %262 = arith.addf %260, %261 : vector<8x32xf32>
    %263 = math.tanh %262 : vector<8x32xf32>
    %264 = arith.mulf %247, %263 : vector<8x32xf32>
    %265 = vector.extract_strided_slice %219 {offsets = [0, 32], sizes = [8, 32], strides = [1, 1]} : vector<8x64xf32> to vector<8x32xf32>
    %266 = arith.mulf %257, %265 : vector<8x32xf32>
    %267 = arith.mulf %256, %255 : vector<8x32xf32>
    %268 = arith.addf %266, %267 : vector<8x32xf32>
    %269 = math.tanh %268 : vector<8x32xf32>
    %270 = arith.mulf %258, %269 : vector<8x32xf32>
    %271 = tpu.concatenate %264, %270 in 1 : vector<8x32xf32>, vector<8x32xf32> -> vector<8x64xf32>
    %272 = tpu.concatenate %262, %268 in 1 : vector<8x32xf32>, vector<8x32xf32> -> vector<8x64xf32>
    %273 = arith.addf %220, %271 : vector<8x64xf32>
    %c5_i32 = arith.constant 5 : i32
    %c8_i32_48 = arith.constant 8 : i32
    %274 = arith.muli %c5_i32, %c8_i32_48 : i32
    %275 = tpu.assume_multiple %274, 8 : i32
    %c7_i32_49 = arith.constant 7 : i32
    %276 = arith.subi %c7_i32_49, %c5_i32 : i32
    %c8_i32_50 = arith.constant 8 : i32
    %277 = arith.muli %276, %c8_i32_50 : i32
    %278 = tpu.assume_multiple %277, 8 : i32
    %279 = arith.index_cast %275 : i32 to index
    %c0_51 = arith.constant 0 : index
    %280 = vector.load %arg5[%279, %c0_51] : memref<64x256xf32, #tpu.memory_space<vmem>>, vector<8x256xf32>
    %281 = arith.index_cast %278 : i32 to index
    %c0_52 = arith.constant 0 : index
    %282 = vector.load %arg5[%281, %c0_52] : memref<64x256xf32, #tpu.memory_space<vmem>>, vector<8x256xf32>
    %cst_53 = arith.constant dense<0.000000e+00> : vector<8x256xf32>
    %283 = tpu.matmul %271, %7, %cst_53 {dimension_numbers = #tpu.dot_dimension_numbers<[1], [0], [0], [1], [0, 0, 1, 1], [], []>} : vector<8x64xf32>, vector<64x256xf32>, vector<8x256xf32> -> vector<8x256xf32>
    %284 = vector.extract_strided_slice %280 {offsets = [0, 0], sizes = [8, 128], strides = [1, 1]} : vector<8x256xf32> to vector<8x128xf32>
    %285 = vector.extract_strided_slice %283 {offsets = [0, 0], sizes = [8, 128], strides = [1, 1]} : vector<8x256xf32> to vector<8x128xf32>
    %286 = arith.addf %284, %285 : vector<8x128xf32>
    %287 = vector.extract_strided_slice %282 {offsets = [0, 128], sizes = [8, 128], strides = [1, 1]} : vector<8x256xf32> to vector<8x128xf32>
    %288 = vector.extract_strided_slice %283 {offsets = [0, 128], sizes = [8, 128], strides = [1, 1]} : vector<8x256xf32> to vector<8x128xf32>
    %289 = arith.addf %287, %288 : vector<8x128xf32>
    %290 = vector.extract_strided_slice %286 {offsets = [0, 0], sizes = [8, 96], strides = [1, 1]} : vector<8x128xf32> to vector<8x96xf32>
    %291 = arith.negf %290 : vector<8x96xf32>
    %292 = math.exp %291 : vector<8x96xf32>
    %cst_54 = arith.constant 1.000000e+00 : f32
    %293 = vector.broadcast %cst_54 : f32 to vector<8x96xf32>
    %294 = arith.addf %293, %292 : vector<8x96xf32>
    %295 = arith.divf %293, %294 : vector<8x96xf32>
    %296 = vector.extract_strided_slice %286 {offsets = [0, 96], sizes = [8, 32], strides = [1, 1]} : vector<8x128xf32> to vector<8x32xf32>
    %297 = math.tanh %296 : vector<8x32xf32>
    %298 = vector.extract_strided_slice %295 {offsets = [0, 0], sizes = [8, 32], strides = [1, 1]} : vector<8x96xf32> to vector<8x32xf32>
    %299 = vector.extract_strided_slice %295 {offsets = [0, 32], sizes = [8, 32], strides = [1, 1]} : vector<8x96xf32> to vector<8x32xf32>
    %300 = vector.extract_strided_slice %295 {offsets = [0, 64], sizes = [8, 32], strides = [1, 1]} : vector<8x96xf32> to vector<8x32xf32>
    %301 = vector.extract_strided_slice %289 {offsets = [0, 0], sizes = [8, 96], strides = [1, 1]} : vector<8x128xf32> to vector<8x96xf32>
    %302 = arith.negf %301 : vector<8x96xf32>
    %303 = math.exp %302 : vector<8x96xf32>
    %cst_55 = arith.constant 1.000000e+00 : f32
    %304 = vector.broadcast %cst_55 : f32 to vector<8x96xf32>
    %305 = arith.addf %304, %303 : vector<8x96xf32>
    %306 = arith.divf %304, %305 : vector<8x96xf32>
    %307 = vector.extract_strided_slice %289 {offsets = [0, 96], sizes = [8, 32], strides = [1, 1]} : vector<8x128xf32> to vector<8x32xf32>
    %308 = math.tanh %307 : vector<8x32xf32>
    %309 = vector.extract_strided_slice %306 {offsets = [0, 0], sizes = [8, 32], strides = [1, 1]} : vector<8x96xf32> to vector<8x32xf32>
    %310 = vector.extract_strided_slice %306 {offsets = [0, 32], sizes = [8, 32], strides = [1, 1]} : vector<8x96xf32> to vector<8x32xf32>
    %311 = vector.extract_strided_slice %306 {offsets = [0, 64], sizes = [8, 32], strides = [1, 1]} : vector<8x96xf32> to vector<8x32xf32>
    %312 = vector.extract_strided_slice %272 {offsets = [0, 0], sizes = [8, 32], strides = [1, 1]} : vector<8x64xf32> to vector<8x32xf32>
    %313 = arith.mulf %299, %312 : vector<8x32xf32>
    %314 = arith.mulf %298, %297 : vector<8x32xf32>
    %315 = arith.addf %313, %314 : vector<8x32xf32>
    %316 = math.tanh %315 : vector<8x32xf32>
    %317 = arith.mulf %300, %316 : vector<8x32xf32>
    %318 = vector.extract_strided_slice %272 {offsets = [0, 32], sizes = [8, 32], strides = [1, 1]} : vector<8x64xf32> to vector<8x32xf32>
    %319 = arith.mulf %310, %318 : vector<8x32xf32>
    %320 = arith.mulf %309, %308 : vector<8x32xf32>
    %321 = arith.addf %319, %320 : vector<8x32xf32>
    %322 = math.tanh %321 : vector<8x32xf32>
    %323 = arith.mulf %311, %322 : vector<8x32xf32>
    %324 = tpu.concatenate %317, %323 in 1 : vector<8x32xf32>, vector<8x32xf32> -> vector<8x64xf32>
    %325 = tpu.concatenate %315, %321 in 1 : vector<8x32xf32>, vector<8x32xf32> -> vector<8x64xf32>
    %326 = arith.addf %273, %324 : vector<8x64xf32>
    %c6_i32 = arith.constant 6 : i32
    %c8_i32_56 = arith.constant 8 : i32
    %327 = arith.muli %c6_i32, %c8_i32_56 : i32
    %328 = tpu.assume_multiple %327, 8 : i32
    %c7_i32_57 = arith.constant 7 : i32
    %329 = arith.subi %c7_i32_57, %c6_i32 : i32
    %c8_i32_58 = arith.constant 8 : i32
    %330 = arith.muli %329, %c8_i32_58 : i32
    %331 = tpu.assume_multiple %330, 8 : i32
    %332 = arith.index_cast %328 : i32 to index
    %c0_59 = arith.constant 0 : index
    %333 = vector.load %arg5[%332, %c0_59] : memref<64x256xf32, #tpu.memory_space<vmem>>, vector<8x256xf32>
    %334 = arith.index_cast %331 : i32 to index
    %c0_60 = arith.constant 0 : index
    %335 = vector.load %arg5[%334, %c0_60] : memref<64x256xf32, #tpu.memory_space<vmem>>, vector<8x256xf32>
    %cst_61 = arith.constant dense<0.000000e+00> : vector<8x256xf32>
    %336 = tpu.matmul %324, %7, %cst_61 {dimension_numbers = #tpu.dot_dimension_numbers<[1], [0], [0], [1], [0, 0, 1, 1], [], []>} : vector<8x64xf32>, vector<64x256xf32>, vector<8x256xf32> -> vector<8x256xf32>
    %337 = vector.extract_strided_slice %333 {offsets = [0, 0], sizes = [8, 128], strides = [1, 1]} : vector<8x256xf32> to vector<8x128xf32>
    %338 = vector.extract_strided_slice %336 {offsets = [0, 0], sizes = [8, 128], strides = [1, 1]} : vector<8x256xf32> to vector<8x128xf32>
    %339 = arith.addf %337, %338 : vector<8x128xf32>
    %340 = vector.extract_strided_slice %335 {offsets = [0, 128], sizes = [8, 128], strides = [1, 1]} : vector<8x256xf32> to vector<8x128xf32>
    %341 = vector.extract_strided_slice %336 {offsets = [0, 128], sizes = [8, 128], strides = [1, 1]} : vector<8x256xf32> to vector<8x128xf32>
    %342 = arith.addf %340, %341 : vector<8x128xf32>
    %343 = vector.extract_strided_slice %339 {offsets = [0, 0], sizes = [8, 96], strides = [1, 1]} : vector<8x128xf32> to vector<8x96xf32>
    %344 = arith.negf %343 : vector<8x96xf32>
    %345 = math.exp %344 : vector<8x96xf32>
    %cst_62 = arith.constant 1.000000e+00 : f32
    %346 = vector.broadcast %cst_62 : f32 to vector<8x96xf32>
    %347 = arith.addf %346, %345 : vector<8x96xf32>
    %348 = arith.divf %346, %347 : vector<8x96xf32>
    %349 = vector.extract_strided_slice %339 {offsets = [0, 96], sizes = [8, 32], strides = [1, 1]} : vector<8x128xf32> to vector<8x32xf32>
    %350 = math.tanh %349 : vector<8x32xf32>
    %351 = vector.extract_strided_slice %348 {offsets = [0, 0], sizes = [8, 32], strides = [1, 1]} : vector<8x96xf32> to vector<8x32xf32>
    %352 = vector.extract_strided_slice %348 {offsets = [0, 32], sizes = [8, 32], strides = [1, 1]} : vector<8x96xf32> to vector<8x32xf32>
    %353 = vector.extract_strided_slice %348 {offsets = [0, 64], sizes = [8, 32], strides = [1, 1]} : vector<8x96xf32> to vector<8x32xf32>
    %354 = vector.extract_strided_slice %342 {offsets = [0, 0], sizes = [8, 96], strides = [1, 1]} : vector<8x128xf32> to vector<8x96xf32>
    %355 = arith.negf %354 : vector<8x96xf32>
    %356 = math.exp %355 : vector<8x96xf32>
    %cst_63 = arith.constant 1.000000e+00 : f32
    %357 = vector.broadcast %cst_63 : f32 to vector<8x96xf32>
    %358 = arith.addf %357, %356 : vector<8x96xf32>
    %359 = arith.divf %357, %358 : vector<8x96xf32>
    %360 = vector.extract_strided_slice %342 {offsets = [0, 96], sizes = [8, 32], strides = [1, 1]} : vector<8x128xf32> to vector<8x32xf32>
    %361 = math.tanh %360 : vector<8x32xf32>
    %362 = vector.extract_strided_slice %359 {offsets = [0, 0], sizes = [8, 32], strides = [1, 1]} : vector<8x96xf32> to vector<8x32xf32>
    %363 = vector.extract_strided_slice %359 {offsets = [0, 32], sizes = [8, 32], strides = [1, 1]} : vector<8x96xf32> to vector<8x32xf32>
    %364 = vector.extract_strided_slice %359 {offsets = [0, 64], sizes = [8, 32], strides = [1, 1]} : vector<8x96xf32> to vector<8x32xf32>
    %365 = vector.extract_strided_slice %325 {offsets = [0, 0], sizes = [8, 32], strides = [1, 1]} : vector<8x64xf32> to vector<8x32xf32>
    %366 = arith.mulf %352, %365 : vector<8x32xf32>
    %367 = arith.mulf %351, %350 : vector<8x32xf32>
    %368 = arith.addf %366, %367 : vector<8x32xf32>
    %369 = math.tanh %368 : vector<8x32xf32>
    %370 = arith.mulf %353, %369 : vector<8x32xf32>
    %371 = vector.extract_strided_slice %325 {offsets = [0, 32], sizes = [8, 32], strides = [1, 1]} : vector<8x64xf32> to vector<8x32xf32>
    %372 = arith.mulf %363, %371 : vector<8x32xf32>
    %373 = arith.mulf %362, %361 : vector<8x32xf32>
    %374 = arith.addf %372, %373 : vector<8x32xf32>
    %375 = math.tanh %374 : vector<8x32xf32>
    %376 = arith.mulf %364, %375 : vector<8x32xf32>
    %377 = tpu.concatenate %370, %376 in 1 : vector<8x32xf32>, vector<8x32xf32> -> vector<8x64xf32>
    %378 = tpu.concatenate %368, %374 in 1 : vector<8x32xf32>, vector<8x32xf32> -> vector<8x64xf32>
    %379 = arith.addf %326, %377 : vector<8x64xf32>
    %c7_i32_64 = arith.constant 7 : i32
    %c8_i32_65 = arith.constant 8 : i32
    %380 = arith.muli %c7_i32_64, %c8_i32_65 : i32
    %381 = tpu.assume_multiple %380, 8 : i32
    %c7_i32_66 = arith.constant 7 : i32
    %382 = arith.subi %c7_i32_66, %c7_i32_64 : i32
    %c8_i32_67 = arith.constant 8 : i32
    %383 = arith.muli %382, %c8_i32_67 : i32
    %384 = tpu.assume_multiple %383, 8 : i32
    %385 = arith.index_cast %381 : i32 to index
    %c0_68 = arith.constant 0 : index
    %386 = vector.load %arg5[%385, %c0_68] : memref<64x256xf32, #tpu.memory_space<vmem>>, vector<8x256xf32>
    %387 = arith.index_cast %384 : i32 to index
    %c0_69 = arith.constant 0 : index
    %388 = vector.load %arg5[%387, %c0_69] : memref<64x256xf32, #tpu.memory_space<vmem>>, vector<8x256xf32>
    %cst_70 = arith.constant dense<0.000000e+00> : vector<8x256xf32>
    %389 = tpu.matmul %377, %7, %cst_70 {dimension_numbers = #tpu.dot_dimension_numbers<[1], [0], [0], [1], [0, 0, 1, 1], [], []>} : vector<8x64xf32>, vector<64x256xf32>, vector<8x256xf32> -> vector<8x256xf32>
    %390 = vector.extract_strided_slice %386 {offsets = [0, 0], sizes = [8, 128], strides = [1, 1]} : vector<8x256xf32> to vector<8x128xf32>
    %391 = vector.extract_strided_slice %389 {offsets = [0, 0], sizes = [8, 128], strides = [1, 1]} : vector<8x256xf32> to vector<8x128xf32>
    %392 = arith.addf %390, %391 : vector<8x128xf32>
    %393 = vector.extract_strided_slice %388 {offsets = [0, 128], sizes = [8, 128], strides = [1, 1]} : vector<8x256xf32> to vector<8x128xf32>
    %394 = vector.extract_strided_slice %389 {offsets = [0, 128], sizes = [8, 128], strides = [1, 1]} : vector<8x256xf32> to vector<8x128xf32>
    %395 = arith.addf %393, %394 : vector<8x128xf32>
    %396 = vector.extract_strided_slice %392 {offsets = [0, 0], sizes = [8, 96], strides = [1, 1]} : vector<8x128xf32> to vector<8x96xf32>
    %397 = arith.negf %396 : vector<8x96xf32>
    %398 = math.exp %397 : vector<8x96xf32>
    %cst_71 = arith.constant 1.000000e+00 : f32
    %399 = vector.broadcast %cst_71 : f32 to vector<8x96xf32>
    %400 = arith.addf %399, %398 : vector<8x96xf32>
    %401 = arith.divf %399, %400 : vector<8x96xf32>
    %402 = vector.extract_strided_slice %392 {offsets = [0, 96], sizes = [8, 32], strides = [1, 1]} : vector<8x128xf32> to vector<8x32xf32>
    %403 = math.tanh %402 : vector<8x32xf32>
    %404 = vector.extract_strided_slice %401 {offsets = [0, 0], sizes = [8, 32], strides = [1, 1]} : vector<8x96xf32> to vector<8x32xf32>
    %405 = vector.extract_strided_slice %401 {offsets = [0, 32], sizes = [8, 32], strides = [1, 1]} : vector<8x96xf32> to vector<8x32xf32>
    %406 = vector.extract_strided_slice %401 {offsets = [0, 64], sizes = [8, 32], strides = [1, 1]} : vector<8x96xf32> to vector<8x32xf32>
    %407 = vector.extract_strided_slice %395 {offsets = [0, 0], sizes = [8, 96], strides = [1, 1]} : vector<8x128xf32> to vector<8x96xf32>
    %408 = arith.negf %407 : vector<8x96xf32>
    %409 = math.exp %408 : vector<8x96xf32>
    %cst_72 = arith.constant 1.000000e+00 : f32
    %410 = vector.broadcast %cst_72 : f32 to vector<8x96xf32>
    %411 = arith.addf %410, %409 : vector<8x96xf32>
    %412 = arith.divf %410, %411 : vector<8x96xf32>
    %413 = vector.extract_strided_slice %395 {offsets = [0, 96], sizes = [8, 32], strides = [1, 1]} : vector<8x128xf32> to vector<8x32xf32>
    %414 = math.tanh %413 : vector<8x32xf32>
    %415 = vector.extract_strided_slice %412 {offsets = [0, 0], sizes = [8, 32], strides = [1, 1]} : vector<8x96xf32> to vector<8x32xf32>
    %416 = vector.extract_strided_slice %412 {offsets = [0, 32], sizes = [8, 32], strides = [1, 1]} : vector<8x96xf32> to vector<8x32xf32>
    %417 = vector.extract_strided_slice %412 {offsets = [0, 64], sizes = [8, 32], strides = [1, 1]} : vector<8x96xf32> to vector<8x32xf32>
    %418 = vector.extract_strided_slice %378 {offsets = [0, 0], sizes = [8, 32], strides = [1, 1]} : vector<8x64xf32> to vector<8x32xf32>
    %419 = arith.mulf %405, %418 : vector<8x32xf32>
    %420 = arith.mulf %404, %403 : vector<8x32xf32>
    %421 = arith.addf %419, %420 : vector<8x32xf32>
    %422 = math.tanh %421 : vector<8x32xf32>
    %423 = arith.mulf %406, %422 : vector<8x32xf32>
    %424 = vector.extract_strided_slice %378 {offsets = [0, 32], sizes = [8, 32], strides = [1, 1]} : vector<8x64xf32> to vector<8x32xf32>
    %425 = arith.mulf %416, %424 : vector<8x32xf32>
    %426 = arith.mulf %415, %414 : vector<8x32xf32>
    %427 = arith.addf %425, %426 : vector<8x32xf32>
    %428 = math.tanh %427 : vector<8x32xf32>
    %429 = arith.mulf %417, %428 : vector<8x32xf32>
    %430 = tpu.concatenate %423, %429 in 1 : vector<8x32xf32>, vector<8x32xf32> -> vector<8x64xf32>
    %431 = tpu.concatenate %421, %427 in 1 : vector<8x32xf32>, vector<8x32xf32> -> vector<8x64xf32>
    %432 = arith.addf %379, %430 : vector<8x64xf32>
    %c8_i32_73 = arith.constant 8 : i32
    %433 = tpu.iota {dimensions = array<i32: 0>} : vector<8x1xi32>
    %c2_i32_74 = arith.constant 2 : i32
    %434 = vector.broadcast %c2_i32_74 : i32 to vector<8x1xi32>
    %435 = arith.cmpi slt, %433, %434 : vector<8x1xi32>
    %436 = arith.extui %435 : vector<8x1xi1> to vector<8x1xi32>
    %437 = arith.sitofp %436 : vector<8x1xi32> to vector<8x1xf32>
    %438 = vector.broadcast %437 : vector<8x1xf32> to vector<8x64xf32>
    %439 = arith.mulf %432, %438 : vector<8x64xf32>
    %cst_75 = arith.constant dense<0.000000e+00> : vector<64xf32>
    %440 = vector.multi_reduction <add>, %439, %cst_75 [0] : vector<8x64xf32> to vector<64xf32>
    %441 = vector.shape_cast %440 : vector<64xf32> to vector<1x64xf32>
    %cst_76 = arith.constant 6.250000e-02 : f32
    %442 = vector.broadcast %cst_76 : f32 to vector<1x64xf32>
    %443 = arith.mulf %441, %442 : vector<1x64xf32>
    %c0_77 = arith.constant 0 : index
    %c0_78 = arith.constant 0 : index
    %444 = vector.load %arg4[%c0_77, %c0_78] : memref<1x64xf32, #tpu.memory_space<vmem>>, vector<1x64xf32>
    tpu.vector_store %arg4[%c0_77, %c0_78], %443 {strides = array<i32>} : memref<1x64xf32, #tpu.memory_space<vmem>>, vector<1x64xf32>,
    return
  }
}

</mosaic_0001>

<llo_original>
// kernel: tpu_custom_call.1
$region0: #{tpu_custom_call.1}
  #allocation0 [shape = 'u32[]', space=smem, size = 0x4, offset = 0x4, fixed_abs, tag = 'smem constant byte address 0x4 - core index']
  #allocation1 [shape = 'u32[144,128]{1,0:T(1,128)}', space=vmem, size = 0x12000, scoped, tag = 'internal scratch']
  #allocation2 [shape = 'f32[64,256]{1,0:T(8,128)}', space=vmem, size = 0x10000, scoped, tag = 'scratch operand']
  %s0 = inlined_call_operand.vmem [shape: f32[64,16], index: 0, kind: input, shape index: {}]
  %s1 = inlined_call_operand.vmem [shape: f32[16,256], index: 1, kind: input, shape index: {}]
  %s2 = inlined_call_operand.vmem [shape: f32[1,256], index: 2, kind: input, shape index: {}]
  %s3 = inlined_call_operand.hbm [shape: f32[64,256], index: 3, kind: input, shape index: {}]
  %s4 = inlined_call_operand.hbm [shape: f32[1,64], index: 4, kind: output, shape index: {}]
  %s5 = sld [smem:[#allocation0]]
  $region30: #{tpu_custom_call.1} parent=0
    _
  %s7 = ssub.s32 1, %s5
  %s8 = scalar_select 0, %s7, %s5
  $region1: #{tpu_custom_call.1} parent=0
    #allocation3 [shape = 'u8[65536]{0}', space=vmem, size = 0x10000, scoped, tag = 'input window, operand 3, single buffered']
    #allocation4 [shape = 's32[1]{0}', space=sflag, size = 0x4, scoped, tag = 'scoped memory for tpu_custom_call.1']
    #allocation5 [shape = 's32[1]{0}', space=sflag, size = 0x4, scoped, tag = 'scoped memory for tpu_custom_call.1']
    #allocation6 [shape = 'u8[512]{0}', space=vmem, size = 0x400, scoped, tag = 'output window, operand 0, single buffered']
    %9 = vsyncpa [#allocation4], 0
    %10 = vsyncpa [#allocation5], 0
    // Predicated region
    $region2: #{tpu_custom_call.1} parent=1 // pred_check
      _
    $region3: #{tpu_custom_call.1} parent=1 // pred_check_branch
      %12 = sbr.rel (0) target = $region5
    $region4: #{tpu_custom_call.1} parent=1 // pred_region
      _
    $region5: #{tpu_custom_call.1} parent=1 // pred_fallthru
      _
    // Predicated region
    $region6: #{tpu_custom_call.1} parent=1 // pred_check
      _
    $region7: #{tpu_custom_call.1} parent=1 // pred_check_branch
      %14 = sbr.rel (0) target = $region9
    $region8: #{tpu_custom_call.1} parent=1 // pred_region
      _
    $region9: #{tpu_custom_call.1} parent=1 // pred_fallthru
      _
    // Predicated region
    $region10: #{tpu_custom_call.1} parent=1 // pred_check
      _
    $region11: #{tpu_custom_call.1} parent=1 // pred_check_branch
      %16 = sbr.rel (0) target = $region13
    $region12: #{tpu_custom_call.1} parent=1 // pred_region
      _
    $region13: #{tpu_custom_call.1} parent=1 // pred_fallthru
      _
    // Predicated region
    $region14: #{tpu_custom_call.1} parent=1 // pred_check
      _
    $region15: #{tpu_custom_call.1} parent=1 // pred_check_branch
      %18 = sbr.rel (0) target = $region17
    $region16: #{tpu_custom_call.1} parent=1 // pred_region
      %s20 = ssub.s32 2048, 2048
      %21 = vsyncadd [#allocation4], %s20
      %s22 = sshll.u32 [#allocation3], 4
      %s23 = int_to_ptr.vmem [resolvable:$true] %s22
      %28 = dma.hbm_to_vmem [thread:$0]  %s3, 2048, %s23, [#allocation4], 256, 256, 16
    $region17: #{tpu_custom_call.1} parent=1 // pred_fallthru
      _
    // Predicated region
    $region18: #{tpu_custom_call.1} parent=1 // pred_check
      _
    $region19: #{tpu_custom_call.1} parent=1 // pred_check_branch
      %30 = sbr.rel (0) target = $region21
    $region20: #{tpu_custom_call.1} parent=1 // pred_region
      %31 = dma.done [#allocation4], 2048
    $region21: #{tpu_custom_call.1} parent=1 // pred_fallthru
      _
    %v32 = vld [vmem:[%s0] sm:$0xff]
    %v33 = vld [vmem:[%s0 + $0x8] sm:$0xff]
    %v34 = vld [vmem:[%s0 + $0x10] sm:$0xff]
    %v35 = vld [vmem:[%s0 + $0x18] sm:$0xff]
    %v36 = vld [vmem:[%s0 + $0x20] sm:$0xff]
    %v37 = vld [vmem:[%s0 + $0x28] sm:$0xff]
    %v38 = vld [vmem:[%s0 + $0x30] sm:$0xff]
    %v39 = vld [vmem:[%s0 + $0x38] sm:$0xff]
    %v40 = vld [vmem:[%s1] sm:$0xff]
    %v41 = vld [vmem:[%s1 + $0x8] sm:$0xff]
    %v42 = vld [vmem:[%s1 + $0x10] sm:$0xff]
    %v43 = vld [vmem:[%s1 + $0x18] sm:$0xff]
    %v44 = vld [vmem:[%s2] sm:$0x3]
    %v46 = vlaneseq
    %v47 = vshrl.u32 %v46, 7
    %v48 = vsub.s32 0, %v47
    %v49 = vrot.slane %v44, %v48
    %v50 = vlaneseq
    %v51 = vshrl.u32 %v50, 7
    %v52 = vsub.s32 1, %v51
    %v53 = vrot.slane %v44, %v52
    %vm56 = vcmask 130048
    %v58 = vsel %vm56, %v32, 0
    %v61 = vsel %vm56, %v33, 0
    %v64 = vsel %vm56, %v34, 0
    %v67 = vsel %vm56, %v35, 0
    %v70 = vsel %vm56, %v36, 0
    %v73 = vsel %vm56, %v37, 0
    %v76 = vsel %vm56, %v38, 0
    %v79 = vsel %vm56, %v39, 0
    %81 = vmatprep.subr.mxu0 0.0
    %82 = vmatpush1.msra.mxu0 0.0
    %83 = vmatprep.subr.mxu0 0.0
    %84 = vmatpush1.msra.mxu0 0.0
    %85 = vmatprep.subr.mxu0 0.0
    %86 = vmatpush1.msra.mxu0 0.0
    %87 = vmatprep.subr.mxu0 0.0
    %88 = vmatpush1.msra.mxu0 0.0
    %89 = vmatprep.subr.mxu0 0.0
    %90 = vmatpush1.msra.mxu0 0.0
    %91 = vmatprep.subr.mxu0 0.0
    %92 = vmatpush1.msra.mxu0 0.0
    %93 = vmatprep.subr.mxu0 0.0
    %94 = vmatpush1.msra.mxu0 0.0
    %95 = vmatprep.subr.mxu0 0.0
    %96 = vmatpush1.msra.mxu0 0.0
    %97 = vmatprep.subr.mxu0 0.0
    %98 = vmatpush1.msra.mxu0 0.0
    %99 = vmatprep.subr.mxu0 0.0
    %100 = vmatpush1.msra.mxu0 0.0
    %101 = vmatprep.subr.mxu0 0.0
    %102 = vmatpush1.msra.mxu0 0.0
    %103 = vmatprep.subr.mxu0 0.0
    %104 = vmatpush1.msra.mxu0 0.0
    %105 = vmatprep.subr.mxu0 0.0
    %106 = vmatpush1.msra.mxu0 0.0
    %107 = vmatprep.subr.mxu0 0.0
    %108 = vmatpush1.msra.mxu0 0.0
    %109 = vmatprep.subr.mxu0 %v43
    %110 = vmatpush1.msra.mxu0 %v42
    %111 = vmatprep.subr.mxu0 %v41
    %112 = vmatpush1.msra.mxu0 %v40
    %113 = vmatprep.subr.mxu0 0.0
    %114 = vmatpush2.msra.mxu0 0.0
    %115 = vmatprep.subr.mxu0 0.0
    %116 = vmatpush2.msra.mxu0 0.0
    %117 = vmatprep.subr.mxu0 0.0
    %118 = vmatpush2.msra.mxu0 0.0
    %119 = vmatprep.subr.mxu0 0.0
    %120 = vmatpush2.msra.mxu0 0.0
    %121 = vmatprep.subr.mxu0 0.0
    %122 = vmatpush2.msra.mxu0 0.0
    %123 = vmatprep.subr.mxu0 0.0
    %124 = vmatpush2.msra.mxu0 0.0
    %125 = vmatprep.subr.mxu0 0.0
    %126 = vmatpush2.msra.mxu0 0.0
    %127 = vmatprep.subr.mxu0 0.0
    %128 = vmatpush2.msra.mxu0 0.0
    %129 = vmatprep.subr.mxu0 0.0
    %130 = vmatpush2.msra.mxu0 0.0
    %131 = vmatprep.subr.mxu0 0.0
    %132 = vmatpush2.msra.mxu0 0.0
    %133 = vmatprep.subr.mxu0 0.0
    %134 = vmatpush2.msra.mxu0 0.0
    %135 = vmatprep.subr.mxu0 0.0
    %136 = vmatpush2.msra.mxu0 0.0
    %137 = vmatprep.subr.mxu0 0.0
    %138 = vmatpush2.msra.mxu0 0.0
    %139 = vmatprep.subr.mxu0 0.0
    %140 = vmatpush2.msra.mxu0 0.0
    %141 = vmatprep.subr.mxu0 0.0
    %142 = vmatpush2.msra.mxu0 0.0
    %143 = vmatprep.subr.mxu0 0.0
    %144 = vmatpush2.msra.mxu0 0.0
    %145 = vmatprep.mubr.f32.mxu0 0.0
    %146 = vmatmul.mubr.f32.gmra.mxu0 %v58
    %v147 = vpop.f32.mrf.mxu0
    %v148 = vadd.f32 %v49, %v147
    %v149 = vpop.f32.mrf.mxu0
    %v150 = vadd.f32 %v53, %v149
    %151 = vmatprep.mubr.f32.mxu0 0.0
    %152 = vmatmul.mubr.f32.gmra.mxu0 %v61
    %v153 = vpop.f32.mrf.mxu0
    %v154 = vadd.f32 %v49, %v153
    %v155 = vpop.f32.mrf.mxu0
    %v156 = vadd.f32 %v53, %v155
    %157 = vmatprep.mubr.f32.mxu0 0.0
    %158 = vmatmul.mubr.f32.gmra.mxu0 %v64
    %v159 = vpop.f32.mrf.mxu0
    %v160 = vadd.f32 %v49, %v159
    %v161 = vpop.f32.mrf.mxu0
    %v162 = vadd.f32 %v53, %v161
    %163 = vmatprep.mubr.f32.mxu0 0.0
    %164 = vmatmul.mubr.f32.gmra.mxu0 %v67
    %v165 = vpop.f32.mrf.mxu0
    %v166 = vadd.f32 %v49, %v165
    %v167 = vpop.f32.mrf.mxu0
    %v168 = vadd.f32 %v53, %v167
    %169 = vmatprep.mubr.f32.mxu0 0.0
    %170 = vmatmul.mubr.f32.gmra.mxu0 %v70
    %v171 = vpop.f32.mrf.mxu0
    %v172 = vadd.f32 %v49, %v171
    %v173 = vpop.f32.mrf.mxu0
    %v174 = vadd.f32 %v53, %v173
    %175 = vmatprep.mubr.f32.mxu0 0.0
    %176 = vmatmul.mubr.f32.gmra.mxu0 %v73
    %v177 = vpop.f32.mrf.mxu0
    %v178 = vadd.f32 %v49, %v177
    %v179 = vpop.f32.mrf.mxu0
    %v180 = vadd.f32 %v53, %v179
    %181 = vmatprep.mubr.f32.mxu0 0.0
    %182 = vmatmul.mubr.f32.gmra.mxu0 %v76
    %v183 = vpop.f32.mrf.mxu0
    %v184 = vadd.f32 %v49, %v183
    %v185 = vpop.f32.mrf.mxu0
    %v186 = vadd.f32 %v53, %v185
    %187 = vmatprep.mubr.f32.mxu0 0.0
    %188 = vmatmul.mubr.f32.gmra.mxu0 %v79
    %v189 = vpop.f32.mrf.mxu0
    %v190 = vadd.f32 %v49, %v189
    %v191 = vpop.f32.mrf.mxu0
    %v192 = vadd.f32 %v53, %v191
    %193 = vdwg.mxu0
    %194 = vst [vmem:[#allocation2] sm:$0xff] %v148
    %195 = vst [vmem:[#allocation2 + $0x8] sm:$0xff] %v150
    %196 = vst [vmem:[#allocation2 + $0x10] sm:$0xff] %v154
    %197 = vst [vmem:[#allocation2 + $0x18] sm:$0xff] %v156
    %198 = vst [vmem:[#allocation2 + $0x20] sm:$0xff] %v160
    %199 = vst [vmem:[#allocation2 + $0x28] sm:$0xff] %v162
    %200 = vst [vmem:[#allocation2 + $0x30] sm:$0xff] %v166
    %201 = vst [vmem:[#allocation2 + $0x38] sm:$0xff] %v168
    %202 = vst [vmem:[#allocation2 + $0x40] sm:$0xff] %v172
    %203 = vst [vmem:[#allocation2 + $0x48] sm:$0xff] %v174
    %204 = vst [vmem:[#allocation2 + $0x50] sm:$0xff] %v178
    %205 = vst [vmem:[#allocation2 + $0x58] sm:$0xff] %v180
    %206 = vst [vmem:[#allocation2 + $0x60] sm:$0xff] %v184
    %207 = vst [vmem:[#allocation2 + $0x68] sm:$0xff] %v186
    %208 = vst [vmem:[#allocation2 + $0x70] sm:$0xff] %v190
    %209 = vst [vmem:[#allocation2 + $0x78] sm:$0xff] %v192
    %v210 = vld [vmem:[#allocation3] sm:$0xff]
    %v211 = vld [vmem:[#allocation3 + $0x8] sm:$0xff]
    %v212 = vld [vmem:[#allocation3 + $0x10] sm:$0xff]
    %v213 = vld [vmem:[#allocation3 + $0x18] sm:$0xff]
    %v214 = vld [vmem:[#allocation3 + $0x20] sm:$0xff]
    %v215 = vld [vmem:[#allocation3 + $0x28] sm:$0xff]
    %v216 = vld [vmem:[#allocation3 + $0x30] sm:$0xff]
    %v217 = vld [vmem:[#allocation3 + $0x38] sm:$0xff]
    %v218 = vld [vmem:[#allocation3 + $0x40] sm:$0xff]
    %v219 = vld [vmem:[#allocation3 + $0x48] sm:$0xff]
    %v220 = vld [vmem:[#allocation3 + $0x50] sm:$0xff]
    %v221 = vld [vmem:[#allocation3 + $0x58] sm:$0xff]
    %v222 = vld [vmem:[#allocation3 + $0x60] sm:$0xff]
    %v223 = vld [vmem:[#allocation3 + $0x68] sm:$0xff]
    %v224 = vld [vmem:[#allocation3 + $0x70] sm:$0xff]
    %v225 = vld [vmem:[#allocation3 + $0x78] sm:$0xff]
    %s226 = smul.u32 0, 2
    %s227 = smul.addr %s226, 8
    %s228 = scalar_lea.vmem [#allocation2], %s227
    %v229 = vld [vmem:[%s228] sm:$0xff]
    %v230 = vld [vmem:[%s228 + $0x8] sm:$0xff]
    %s231 = smul.u32 7, 2
    %s232 = smul.addr %s231, 8
    %s233 = scalar_lea.vmem [#allocation2], %s232
    %v234 = vld [vmem:[%s233] sm:$0xff]
    %v235 = vld [vmem:[%s233 + $0x8] sm:$0xff]
    %vm236 = vcmask 523264
    %v238 = vsel %vm236, 0.0, 0
    %240 = vmatprep.subr.mxu0 0.0
    %241 = vmatpush1.msra.mxu0 0.0
    %242 = vmatprep.subr.mxu0 0.0
    %243 = vmatpush1.msra.mxu0 0.0
    %244 = vmatprep.subr.mxu0 0.0
    %245 = vmatpush1.msra.mxu0 0.0
    %246 = vmatprep.subr.mxu0 0.0
    %247 = vmatpush1.msra.mxu0 0.0
    %248 = vmatprep.subr.mxu0 0.0
    %249 = vmatpush1.msra.mxu0 0.0
    %250 = vmatprep.subr.mxu0 0.0
    %251 = vmatpush1.msra.mxu0 0.0
    %252 = vmatprep.subr.mxu0 0.0
    %253 = vmatpush1.msra.mxu0 0.0
    %254 = vmatprep.subr.mxu0 0.0
    %255 = vmatpush1.msra.mxu0 0.0
    %256 = vmatprep.subr.mxu0 %v225
    %257 = vmatpush1.msra.mxu0 %v224
    %258 = vmatprep.subr.mxu0 %v223
    %259 = vmatpush1.msra.mxu0 %v222
    %260 = vmatprep.subr.mxu0 %v221
    %261 = vmatpush1.msra.mxu0 %v220
    %262 = vmatprep.subr.mxu0 %v219
    %263 = vmatpush1.msra.mxu0 %v218
    %264 = vmatprep.subr.mxu0 %v217
    %265 = vmatpush1.msra.mxu0 %v216
    %266 = vmatprep.subr.mxu0 %v215
    %267 = vmatpush1.msra.mxu0 %v214
    %268 = vmatprep.subr.mxu0 %v213
    %269 = vmatpush1.msra.mxu0 %v212
    %270 = vmatprep.subr.mxu0 %v211
    %271 = vmatpush1.msra.mxu0 %v210
    %272 = vmatprep.subr.mxu0 0.0
    %273 = vmatpush2.msra.mxu0 0.0
    %274 = vmatprep.subr.mxu0 0.0
    %275 = vmatpush2.msra.mxu0 0.0
    %276 = vmatprep.subr.mxu0 0.0
    %277 = vmatpush2.msra.mxu0 0.0
    %278 = vmatprep.subr.mxu0 0.0
    %279 = vmatpush2.msra.mxu0 0.0
    %280 = vmatprep.subr.mxu0 0.0
    %281 = vmatpush2.msra.mxu0 0.0
    %282 = vmatprep.subr.mxu0 0.0
    %283 = vmatpush2.msra.mxu0 0.0
    %284 = vmatprep.subr.mxu0 0.0
    %285 = vmatpush2.msra.mxu0 0.0
    %286 = vmatprep.subr.mxu0 0.0
    %287 = vmatpush2.msra.mxu0 0.0
    %288 = vmatprep.subr.mxu0 0.0
    %289 = vmatpush2.msra.mxu0 0.0
    %290 = vmatprep.subr.mxu0 0.0
    %291 = vmatpush2.msra.mxu0 0.0
    %292 = vmatprep.subr.mxu0 0.0
    %293 = vmatpush2.msra.mxu0 0.0
    %294 = vmatprep.subr.mxu0 0.0
    %295 = vmatpush2.msra.mxu0 0.0
    %296 = vmatprep.subr.mxu0 0.0
    %297 = vmatpush2.msra.mxu0 0.0
    %298 = vmatprep.subr.mxu0 0.0
    %299 = vmatpush2.msra.mxu0 0.0
    %300 = vmatprep.subr.mxu0 0.0
    %301 = vmatpush2.msra.mxu0 0.0
    %302 = vmatprep.subr.mxu0 0.0
    %303 = vmatpush2.msra.mxu0 0.0
    %304 = vmatprep.mubr.f32.mxu0 0.0
    %305 = vmatmul.mubr.f32.gmra.mxu0 %v238
    %v306 = vpop.f32.mrf.mxu0
    %v307 = vadd.f32 0.0, %v306
    %v308 = vpop.f32.mrf.mxu0
    %v309 = vadd.f32 0.0, %v308
    %310 = vdwg.mxu0
    %v311 = vadd.f32 %v229, %v307
    %v312 = vadd.f32 %v235, %v309
    %v313 = vxor.u32 %v311, 2147483648
    %v314 = vmul.f32 %v313, 1.442695
    %v315 = vpow.pop %v314
    %v316 = vadd.f32 %v315, 1.0
    %v317 = vrcp.pop %v316
    %v318 = vmul.f32 1.0, %v317
    %v319 = vtanh.pop %v311
    %v320 = vxor.u32 %v312, 2147483648
    %v321 = vmul.f32 %v320, 1.442695
    %v322 = vpow.pop %v321
    %v323 = vadd.f32 %v322, 1.0
    %v324 = vrcp.pop %v323
    %v325 = vmul.f32 1.0, %v324
    %v326 = vtanh.pop %v312
    %v327 = vmul.f32 %v318, 0.0
    %329 = vrot.lane.b32.xlu0 %v319, 32
    %v330 = vpop.permute.xlu0 %329
    %v332 = vmul.f32 %v318, %v330
    %334 = vrot.lane.b32.xlu0 %v332, 32
    %v335 = vpop.permute.xlu0 %334
    %v337 = vadd.f32 %v327, %v335
    %v338 = vtanh.pop %v337
    %340 = vrot.lane.b32.xlu0 %v338, 32
    %v341 = vpop.permute.xlu0 %340
    %v343 = vmul.f32 %v318, %v341
    %v344 = vmul.f32 %v325, 0.0
    %346 = vrot.lane.b32.xlu0 %v326, 32
    %v347 = vpop.permute.xlu0 %346
    %v349 = vmul.f32 %v325, %v347
    %351 = vrot.lane.b32.xlu0 %v349, 32
    %v352 = vpop.permute.xlu0 %351
    %v354 = vadd.f32 %v344, %v352
    %v355 = vtanh.pop %v354
    %357 = vrot.lane.b32.xlu0 %v355, 32
    %v358 = vpop.permute.xlu0 %357
    %v360 = vmul.f32 %v325, %v358
    %362 = vrot.lane.b32.xlu0 %v343, 64
    %v363 = vpop.permute.xlu0 %362
    %366 = vrot.lane.b32.xlu0 %v360, 96
    %v367 = vpop.permute.xlu0 %366
    %vm369 = vcmask 261120
    %v370 = vsel %vm369, %v363, %v367
    %372 = vrot.lane.b32.xlu0 %v337, 96
    %v373 = vpop.permute.xlu0 %372
    %v375 = vsel %vm369, %v373, %v354
    %v376 = vadd.f32 %v370, 0.0
    %s377 = smul.u32 1, 2
    %s378 = smul.addr %s377, 8
    %s379 = scalar_lea.vmem [#allocation2], %s378
    %v380 = vld [vmem:[%s379] sm:$0xff]
    %v381 = vld [vmem:[%s379 + $0x8] sm:$0xff]
    %s382 = smul.u32 6, 2
    %s383 = smul.addr %s382, 8
    %s384 = scalar_lea.vmem [#allocation2], %s383
    %v385 = vld [vmem:[%s384] sm:$0xff]
    %v386 = vld [vmem:[%s384 + $0x8] sm:$0xff]
    %v388 = vsel %vm236, %v370, 0
    %390 = vmatprep.subr.mxu0 0.0
    %391 = vmatpush1.msra.mxu0 0.0
    %392 = vmatprep.subr.mxu0 0.0
    %393 = vmatpush1.msra.mxu0 0.0
    %394 = vmatprep.subr.mxu0 0.0
    %395 = vmatpush1.msra.mxu0 0.0
    %396 = vmatprep.subr.mxu0 0.0
    %397 = vmatpush1.msra.mxu0 0.0
    %398 = vmatprep.subr.mxu0 0.0
    %399 = vmatpush1.msra.mxu0 0.0
    %400 = vmatprep.subr.mxu0 0.0
    %401 = vmatpush1.msra.mxu0 0.0
    %402 = vmatprep.subr.mxu0 0.0
    %403 = vmatpush1.msra.mxu0 0.0
    %404 = vmatprep.subr.mxu0 0.0
    %405 = vmatpush1.msra.mxu0 0.0
    %406 = vmatprep.subr.mxu0 %v225
    %407 = vmatpush1.msra.mxu0 %v224
    %408 = vmatprep.subr.mxu0 %v223
    %409 = vmatpush1.msra.mxu0 %v222
    %410 = vmatprep.subr.mxu0 %v221
    %411 = vmatpush1.msra.mxu0 %v220
    %412 = vmatprep.subr.mxu0 %v219
    %413 = vmatpush1.msra.mxu0 %v218
    %414 = vmatprep.subr.mxu0 %v217
    %415 = vmatpush1.msra.mxu0 %v216
    %416 = vmatprep.subr.mxu0 %v215
    %417 = vmatpush1.msra.mxu0 %v214
    %418 = vmatprep.subr.mxu0 %v213
    %419 = vmatpush1.msra.mxu0 %v212
    %420 = vmatprep.subr.mxu0 %v211
    %421 = vmatpush1.msra.mxu0 %v210
    %422 = vmatprep.subr.mxu0 0.0
    %423 = vmatpush2.msra.mxu0 0.0
    %424 = vmatprep.subr.mxu0 0.0
    %425 = vmatpush2.msra.mxu0 0.0
    %426 = vmatprep.subr.mxu0 0.0
    %427 = vmatpush2.msra.mxu0 0.0
    %428 = vmatprep.subr.mxu0 0.0
    %429 = vmatpush2.msra.mxu0 0.0
    %430 = vmatprep.subr.mxu0 0.0
    %431 = vmatpush2.msra.mxu0 0.0
    %432 = vmatprep.subr.mxu0 0.0
    %433 = vmatpush2.msra.mxu0 0.0
    %434 = vmatprep.subr.mxu0 0.0
    %435 = vmatpush2.msra.mxu0 0.0
    %436 = vmatprep.subr.mxu0 0.0
    %437 = vmatpush2.msra.mxu0 0.0
    %438 = vmatprep.subr.mxu0 0.0
    %439 = vmatpush2.msra.mxu0 0.0
    %440 = vmatprep.subr.mxu0 0.0
    %441 = vmatpush2.msra.mxu0 0.0
    %442 = vmatprep.subr.mxu0 0.0
    %443 = vmatpush2.msra.mxu0 0.0
    %444 = vmatprep.subr.mxu0 0.0
    %445 = vmatpush2.msra.mxu0 0.0
    %446 = vmatprep.subr.mxu0 0.0
    %447 = vmatpush2.msra.mxu0 0.0
    %448 = vmatprep.subr.mxu0 0.0
    %449 = vmatpush2.msra.mxu0 0.0
    %450 = vmatprep.subr.mxu0 0.0
    %451 = vmatpush2.msra.mxu0 0.0
    %452 = vmatprep.subr.mxu0 0.0
    %453 = vmatpush2.msra.mxu0 0.0
    %454 = vmatprep.mubr.f32.mxu0 0.0
    %455 = vmatmul.mubr.f32.gmra.mxu0 %v388
    %v456 = vpop.f32.mrf.mxu0
    %v457 = vadd.f32 0.0, %v456
    %v458 = vpop.f32.mrf.mxu0
    %v459 = vadd.f32 0.0, %v458
    %460 = vdwg.mxu0
    %v461 = vadd.f32 %v380, %v457
    %v462 = vadd.f32 %v386, %v459
    %v463 = vxor.u32 %v461, 2147483648
    %v464 = vmul.f32 %v463, 1.442695
    %v465 = vpow.pop %v464
    %v466 = vadd.f32 %v465, 1.0
    %v467 = vrcp.pop %v466
    %v468 = vmul.f32 1.0, %v467
    %v469 = vtanh.pop %v461
    %v470 = vxor.u32 %v462, 2147483648
    %v471 = vmul.f32 %v470, 1.442695
    %v472 = vpow.pop %v471
    %v473 = vadd.f32 %v472, 1.0
    %v474 = vrcp.pop %v473
    %v475 = vmul.f32 1.0, %v474
    %v476 = vtanh.pop %v462
    %478 = vrot.lane.b32.xlu0 %v375, 32
    %v479 = vpop.permute.xlu0 %478
    %v481 = vmul.f32 %v468, %v479
    %483 = vrot.lane.b32.xlu0 %v469, 32
    %v484 = vpop.permute.xlu0 %483
    %v486 = vmul.f32 %v468, %v484
    %488 = vrot.lane.b32.xlu0 %v486, 32
    %v489 = vpop.permute.xlu0 %488
    %v491 = vadd.f32 %v481, %v489
    %v492 = vtanh.pop %v491
    %494 = vrot.lane.b32.xlu0 %v492, 32
    %v495 = vpop.permute.xlu0 %494
    %v497 = vmul.f32 %v468, %v495
    %v498 = vmul.f32 %v475, %v375
    %500 = vrot.lane.b32.xlu0 %v476, 32
    %v501 = vpop.permute.xlu0 %500
    %v503 = vmul.f32 %v475, %v501
    %505 = vrot.lane.b32.xlu0 %v503, 32
    %v506 = vpop.permute.xlu0 %505
    %v508 = vadd.f32 %v498, %v506
    %v509 = vtanh.pop %v508
    %511 = vrot.lane.b32.xlu0 %v509, 32
    %v512 = vpop.permute.xlu0 %511
    %v514 = vmul.f32 %v475, %v512
    %516 = vrot.lane.b32.xlu0 %v497, 64
    %v517 = vpop.permute.xlu0 %516
    %520 = vrot.lane.b32.xlu0 %v514, 96
    %v521 = vpop.permute.xlu0 %520
    %v523 = vsel %vm369, %v517, %v521
    %525 = vrot.lane.b32.xlu0 %v491, 96
    %v526 = vpop.permute.xlu0 %525
    %v528 = vsel %vm369, %v526, %v508
    %v529 = vadd.f32 %v376, %v523
    %s530 = smul.u32 2, 2
    %s531 = smul.addr %s530, 8
    %s532 = scalar_lea.vmem [#allocation2], %s531
    %v533 = vld [vmem:[%s532] sm:$0xff]
    %v534 = vld [vmem:[%s532 + $0x8] sm:$0xff]
    %s535 = smul.u32 5, 2
    %s536 = smul.addr %s535, 8
    %s537 = scalar_lea.vmem [#allocation2], %s536
    %v538 = vld [vmem:[%s537] sm:$0xff]
    %v539 = vld [vmem:[%s537 + $0x8] sm:$0xff]
    %v541 = vsel %vm236, %v523, 0
    %543 = vmatprep.subr.mxu0 0.0
    %544 = vmatpush1.msra.mxu0 0.0
    %545 = vmatprep.subr.mxu0 0.0
    %546 = vmatpush1.msra.mxu0 0.0
    %547 = vmatprep.subr.mxu0 0.0
    %548 = vmatpush1.msra.mxu0 0.0
    %549 = vmatprep.subr.mxu0 0.0
    %550 = vmatpush1.msra.mxu0 0.0
    %551 = vmatprep.subr.mxu0 0.0
    %552 = vmatpush1.msra.mxu0 0.0
    %553 = vmatprep.subr.mxu0 0.0
    %554 = vmatpush1.msra.mxu0 0.0
    %555 = vmatprep.subr.mxu0 0.0
    %556 = vmatpush1.msra.mxu0 0.0
    %557 = vmatprep.subr.mxu0 0.0
    %558 = vmatpush1.msra.mxu0 0.0
    %559 = vmatprep.subr.mxu0 %v225
    %560 = vmatpush1.msra.mxu0 %v224
    %561 = vmatprep.subr.mxu0 %v223
    %562 = vmatpush1.msra.mxu0 %v222
    %563 = vmatprep.subr.mxu0 %v221
    %564 = vmatpush1.msra.mxu0 %v220
    %565 = vmatprep.subr.mxu0 %v219
    %566 = vmatpush1.msra.mxu0 %v218
    %567 = vmatprep.subr.mxu0 %v217
    %568 = vmatpush1.msra.mxu0 %v216
    %569 = vmatprep.subr.mxu0 %v215
    %570 = vmatpush1.msra.mxu0 %v214
    %571 = vmatprep.subr.mxu0 %v213
    %572 = vmatpush1.msra.mxu0 %v212
    %573 = vmatprep.subr.mxu0 %v211
    %574 = vmatpush1.msra.mxu0 %v210
    %575 = vmatprep.subr.mxu0 0.0
    %576 = vmatpush2.msra.mxu0 0.0
    %577 = vmatprep.subr.mxu0 0.0
    %578 = vmatpush2.msra.mxu0 0.0
    %579 = vmatprep.subr.mxu0 0.0
    %580 = vmatpush2.msra.mxu0 0.0
    %581 = vmatprep.subr.mxu0 0.0
    %582 = vmatpush2.msra.mxu0 0.0
    %583 = vmatprep.subr.mxu0 0.0
    %584 = vmatpush2.msra.mxu0 0.0
    %585 = vmatprep.subr.mxu0 0.0
    %586 = vmatpush2.msra.mxu0 0.0
    %587 = vmatprep.subr.mxu0 0.0
    %588 = vmatpush2.msra.mxu0 0.0
    %589 = vmatprep.subr.mxu0 0.0
    %590 = vmatpush2.msra.mxu0 0.0
    %591 = vmatprep.subr.mxu0 0.0
    %592 = vmatpush2.msra.mxu0 0.0
    %593 = vmatprep.subr.mxu0 0.0
    %594 = vmatpush2.msra.mxu0 0.0
    %595 = vmatprep.subr.mxu0 0.0
    %596 = vmatpush2.msra.mxu0 0.0
    %597 = vmatprep.subr.mxu0 0.0
    %598 = vmatpush2.msra.mxu0 0.0
    %599 = vmatprep.subr.mxu0 0.0
    %600 = vmatpush2.msra.mxu0 0.0
    %601 = vmatprep.subr.mxu0 0.0
    %602 = vmatpush2.msra.mxu0 0.0
    %603 = vmatprep.subr.mxu0 0.0
    %604 = vmatpush2.msra.mxu0 0.0
    %605 = vmatprep.subr.mxu0 0.0
    %606 = vmatpush2.msra.mxu0 0.0
    %607 = vmatprep.mubr.f32.mxu0 0.0
    %608 = vmatmul.mubr.f32.gmra.mxu0 %v541
    %v609 = vpop.f32.mrf.mxu0
    %v610 = vadd.f32 0.0, %v609
    %v611 = vpop.f32.mrf.mxu0
    %v612 = vadd.f32 0.0, %v611
    %613 = vdwg.mxu0
    %v614 = vadd.f32 %v533, %v610
    %v615 = vadd.f32 %v539, %v612
    %v616 = vxor.u32 %v614, 2147483648
    %v617 = vmul.f32 %v616, 1.442695
    %v618 = vpow.pop %v617
    %v619 = vadd.f32 %v618, 1.0
    %v620 = vrcp.pop %v619
    %v621 = vmul.f32 1.0, %v620
    %v622 = vtanh.pop %v614
    %v623 = vxor.u32 %v615, 2147483648
    %v624 = vmul.f32 %v623, 1.442695
    %v625 = vpow.pop %v624
    %v626 = vadd.f32 %v625, 1.0
    %v627 = vrcp.pop %v626
    %v628 = vmul.f32 1.0, %v627
    %v629 = vtanh.pop %v615
    %631 = vrot.lane.b32.xlu0 %v528, 32
    %v632 = vpop.permute.xlu0 %631
    %v634 = vmul.f32 %v621, %v632
    %636 = vrot.lane.b32.xlu0 %v622, 32
    %v637 = vpop.permute.xlu0 %636
    %v639 = vmul.f32 %v621, %v637
    %641 = vrot.lane.b32.xlu0 %v639, 32
    %v642 = vpop.permute.xlu0 %641
    %v644 = vadd.f32 %v634, %v642
    %v645 = vtanh.pop %v644
    %647 = vrot.lane.b32.xlu0 %v645, 32
    %v648 = vpop.permute.xlu0 %647
    %v650 = vmul.f32 %v621, %v648
    %v651 = vmul.f32 %v628, %v528
    %653 = vrot.lane.b32.xlu0 %v629, 32
    %v654 = vpop.permute.xlu0 %653
    %v656 = vmul.f32 %v628, %v654
    %658 = vrot.lane.b32.xlu0 %v656, 32
    %v659 = vpop.permute.xlu0 %658
    %v661 = vadd.f32 %v651, %v659
    %v662 = vtanh.pop %v661
    %664 = vrot.lane.b32.xlu0 %v662, 32
    %v665 = vpop.permute.xlu0 %664
    %v667 = vmul.f32 %v628, %v665
    %669 = vrot.lane.b32.xlu0 %v650, 64
    %v670 = vpop.permute.xlu0 %669
    %673 = vrot.lane.b32.xlu0 %v667, 96
    %v674 = vpop.permute.xlu0 %673
    %v676 = vsel %vm369, %v670, %v674
    %678 = vrot.lane.b32.xlu0 %v644, 96
    %v679 = vpop.permute.xlu0 %678
    %v681 = vsel %vm369, %v679, %v661
    %v682 = vadd.f32 %v529, %v676
    %s683 = smul.u32 3, 2
    %s684 = smul.addr %s683, 8
    %s685 = scalar_lea.vmem [#allocation2], %s684
    %v686 = vld [vmem:[%s685] sm:$0xff]
    %v687 = vld [vmem:[%s685 + $0x8] sm:$0xff]
    %s688 = smul.u32 4, 2
    %s689 = smul.addr %s688, 8
    %s690 = scalar_lea.vmem [#allocation2], %s689
    %v691 = vld [vmem:[%s690] sm:$0xff]
    %v692 = vld [vmem:[%s690 + $0x8] sm:$0xff]
    %v694 = vsel %vm236, %v676, 0
    %696 = vmatprep.subr.mxu0 0.0
    %697 = vmatpush1.msra.mxu0 0.0
    %698 = vmatprep.subr.mxu0 0.0
    %699 = vmatpush1.msra.mxu0 0.0
    %700 = vmatprep.subr.mxu0 0.0
    %701 = vmatpush1.msra.mxu0 0.0
    %702 = vmatprep.subr.mxu0 0.0
    %703 = vmatpush1.msra.mxu0 0.0
    %704 = vmatprep.subr.mxu0 0.0
    %705 = vmatpush1.msra.mxu0 0.0
    %706 = vmatprep.subr.mxu0 0.0
    %707 = vmatpush1.msra.mxu0 0.0
    %708 = vmatprep.subr.mxu0 0.0
    %709 = vmatpush1.msra.mxu0 0.0
    %710 = vmatprep.subr.mxu0 0.0
    %711 = vmatpush1.msra.mxu0 0.0
    %712 = vmatprep.subr.mxu0 %v225
    %713 = vmatpush1.msra.mxu0 %v224
    %714 = vmatprep.subr.mxu0 %v223
    %715 = vmatpush1.msra.mxu0 %v222
    %716 = vmatprep.subr.mxu0 %v221
    %717 = vmatpush1.msra.mxu0 %v220
    %718 = vmatprep.subr.mxu0 %v219
    %719 = vmatpush1.msra.mxu0 %v218
    %720 = vmatprep.subr.mxu0 %v217
    %721 = vmatpush1.msra.mxu0 %v216
    %722 = vmatprep.subr.mxu0 %v215
    %723 = vmatpush1.msra.mxu0 %v214
    %724 = vmatprep.subr.mxu0 %v213
    %725 = vmatpush1.msra.mxu0 %v212
    %726 = vmatprep.subr.mxu0 %v211
    %727 = vmatpush1.msra.mxu0 %v210
    %728 = vmatprep.subr.mxu0 0.0
    %729 = vmatpush2.msra.mxu0 0.0
    %730 = vmatprep.subr.mxu0 0.0
    %731 = vmatpush2.msra.mxu0 0.0
    %732 = vmatprep.subr.mxu0 0.0
    %733 = vmatpush2.msra.mxu0 0.0
    %734 = vmatprep.subr.mxu0 0.0
    %735 = vmatpush2.msra.mxu0 0.0
    %736 = vmatprep.subr.mxu0 0.0
    %737 = vmatpush2.msra.mxu0 0.0
    %738 = vmatprep.subr.mxu0 0.0
    %739 = vmatpush2.msra.mxu0 0.0
    %740 = vmatprep.subr.mxu0 0.0
    %741 = vmatpush2.msra.mxu0 0.0
    %742 = vmatprep.subr.mxu0 0.0
    %743 = vmatpush2.msra.mxu0 0.0
    %744 = vmatprep.subr.mxu0 0.0
    %745 = vmatpush2.msra.mxu0 0.0
    %746 = vmatprep.subr.mxu0 0.0
    %747 = vmatpush2.msra.mxu0 0.0
    %748 = vmatprep.subr.mxu0 0.0
    %749 = vmatpush2.msra.mxu0 0.0
    %750 = vmatprep.subr.mxu0 0.0
    %751 = vmatpush2.msra.mxu0 0.0
    %752 = vmatprep.subr.mxu0 0.0
    %753 = vmatpush2.msra.mxu0 0.0
    %754 = vmatprep.subr.mxu0 0.0
    %755 = vmatpush2.msra.mxu0 0.0
    %756 = vmatprep.subr.mxu0 0.0
    %757 = vmatpush2.msra.mxu0 0.0
    %758 = vmatprep.subr.mxu0 0.0
    %759 = vmatpush2.msra.mxu0 0.0
    %760 = vmatprep.mubr.f32.mxu0 0.0
    %761 = vmatmul.mubr.f32.gmra.mxu0 %v694
    %v762 = vpop.f32.mrf.mxu0
    %v763 = vadd.f32 0.0, %v762
    %v764 = vpop.f32.mrf.mxu0
    %v765 = vadd.f32 0.0, %v764
    %766 = vdwg.mxu0
    %v767 = vadd.f32 %v686, %v763
    %v768 = vadd.f32 %v692, %v765
    %v769 = vxor.u32 %v767, 2147483648
    %v770 = vmul.f32 %v769, 1.442695
    %v771 = vpow.pop %v770
    %v772 = vadd.f32 %v771, 1.0
    %v773 = vrcp.pop %v772
    %v774 = vmul.f32 1.0, %v773
    %v775 = vtanh.pop %v767
    %v776 = vxor.u32 %v768, 2147483648
    %v777 = vmul.f32 %v776, 1.442695
    %v778 = vpow.pop %v777
    %v779 = vadd.f32 %v778, 1.0
    %v780 = vrcp.pop %v779
    %v781 = vmul.f32 1.0, %v780
    %v782 = vtanh.pop %v768
    %784 = vrot.lane.b32.xlu0 %v681, 32
    %v785 = vpop.permute.xlu0 %784
    %v787 = vmul.f32 %v774, %v785
    %789 = vrot.lane.b32.xlu0 %v775, 32
    %v790 = vpop.permute.xlu0 %789
    %v792 = vmul.f32 %v774, %v790
    %794 = vrot.lane.b32.xlu0 %v792, 32
    %v795 = vpop.permute.xlu0 %794
    %v797 = vadd.f32 %v787, %v795
    %v798 = vtanh.pop %v797
    %800 = vrot.lane.b32.xlu0 %v798, 32
    %v801 = vpop.permute.xlu0 %800
    %v803 = vmul.f32 %v774, %v801
    %v804 = vmul.f32 %v781, %v681
    %806 = vrot.lane.b32.xlu0 %v782, 32
    %v807 = vpop.permute.xlu0 %806
    %v809 = vmul.f32 %v781, %v807
    %811 = vrot.lane.b32.xlu0 %v809, 32
    %v812 = vpop.permute.xlu0 %811
    %v814 = vadd.f32 %v804, %v812
    %v815 = vtanh.pop %v814
    %817 = vrot.lane.b32.xlu0 %v815, 32
    %v818 = vpop.permute.xlu0 %817
    %v820 = vmul.f32 %v781, %v818
    %822 = vrot.lane.b32.xlu0 %v803, 64
    %v823 = vpop.permute.xlu0 %822
    %826 = vrot.lane.b32.xlu0 %v820, 96
    %v827 = vpop.permute.xlu0 %826
    %v829 = vsel %vm369, %v823, %v827
    %831 = vrot.lane.b32.xlu0 %v797, 96
    %v832 = vpop.permute.xlu0 %831
    %v834 = vsel %vm369, %v832, %v814
    %v835 = vadd.f32 %v682, %v829
    %v837 = vsel %vm236, %v829, 0
    %839 = vmatprep.subr.mxu0 0.0
    %840 = vmatpush1.msra.mxu0 0.0
    %841 = vmatprep.subr.mxu0 0.0
    %842 = vmatpush1.msra.mxu0 0.0
    %843 = vmatprep.subr.mxu0 0.0
    %844 = vmatpush1.msra.mxu0 0.0
    %845 = vmatprep.subr.mxu0 0.0
    %846 = vmatpush1.msra.mxu0 0.0
    %847 = vmatprep.subr.mxu0 0.0
    %848 = vmatpush1.msra.mxu0 0.0
    %849 = vmatprep.subr.mxu0 0.0
    %850 = vmatpush1.msra.mxu0 0.0
    %851 = vmatprep.subr.mxu0 0.0
    %852 = vmatpush1.msra.mxu0 0.0
    %853 = vmatprep.subr.mxu0 0.0
    %854 = vmatpush1.msra.mxu0 0.0
    %855 = vmatprep.subr.mxu0 %v225
    %856 = vmatpush1.msra.mxu0 %v224
    %857 = vmatprep.subr.mxu0 %v223
    %858 = vmatpush1.msra.mxu0 %v222
    %859 = vmatprep.subr.mxu0 %v221
    %860 = vmatpush1.msra.mxu0 %v220
    %861 = vmatprep.subr.mxu0 %v219
    %862 = vmatpush1.msra.mxu0 %v218
    %863 = vmatprep.subr.mxu0 %v217
    %864 = vmatpush1.msra.mxu0 %v216
    %865 = vmatprep.subr.mxu0 %v215
    %866 = vmatpush1.msra.mxu0 %v214
    %867 = vmatprep.subr.mxu0 %v213
    %868 = vmatpush1.msra.mxu0 %v212
    %869 = vmatprep.subr.mxu0 %v211
    %870 = vmatpush1.msra.mxu0 %v210
    %871 = vmatprep.subr.mxu0 0.0
    %872 = vmatpush2.msra.mxu0 0.0
    %873 = vmatprep.subr.mxu0 0.0
    %874 = vmatpush2.msra.mxu0 0.0
    %875 = vmatprep.subr.mxu0 0.0
    %876 = vmatpush2.msra.mxu0 0.0
    %877 = vmatprep.subr.mxu0 0.0
    %878 = vmatpush2.msra.mxu0 0.0
    %879 = vmatprep.subr.mxu0 0.0
    %880 = vmatpush2.msra.mxu0 0.0
    %881 = vmatprep.subr.mxu0 0.0
    %882 = vmatpush2.msra.mxu0 0.0
    %883 = vmatprep.subr.mxu0 0.0
    %884 = vmatpush2.msra.mxu0 0.0
    %885 = vmatprep.subr.mxu0 0.0
    %886 = vmatpush2.msra.mxu0 0.0
    %887 = vmatprep.subr.mxu0 0.0
    %888 = vmatpush2.msra.mxu0 0.0
    %889 = vmatprep.subr.mxu0 0.0
    %890 = vmatpush2.msra.mxu0 0.0
    %891 = vmatprep.subr.mxu0 0.0
    %892 = vmatpush2.msra.mxu0 0.0
    %893 = vmatprep.subr.mxu0 0.0
    %894 = vmatpush2.msra.mxu0 0.0
    %895 = vmatprep.subr.mxu0 0.0
    %896 = vmatpush2.msra.mxu0 0.0
    %897 = vmatprep.subr.mxu0 0.0
    %898 = vmatpush2.msra.mxu0 0.0
    %899 = vmatprep.subr.mxu0 0.0
    %900 = vmatpush2.msra.mxu0 0.0
    %901 = vmatprep.subr.mxu0 0.0
    %902 = vmatpush2.msra.mxu0 0.0
    %903 = vmatprep.mubr.f32.mxu0 0.0
    %904 = vmatmul.mubr.f32.gmra.mxu0 %v837
    %v905 = vpop.f32.mrf.mxu0
    %v906 = vadd.f32 0.0, %v905
    %v907 = vpop.f32.mrf.mxu0
    %v908 = vadd.f32 0.0, %v907
    %909 = vdwg.mxu0
    %v910 = vadd.f32 %v691, %v906
    %v911 = vadd.f32 %v687, %v908
    %v912 = vxor.u32 %v910, 2147483648
    %v913 = vmul.f32 %v912, 1.442695
    %v914 = vpow.pop %v913
    %v915 = vadd.f32 %v914, 1.0
    %v916 = vrcp.pop %v915
    %v917 = vmul.f32 1.0, %v916
    %v918 = vtanh.pop %v910
    %v919 = vxor.u32 %v911, 2147483648
    %v920 = vmul.f32 %v919, 1.442695
    %v921 = vpow.pop %v920
    %v922 = vadd.f32 %v921, 1.0
    %v923 = vrcp.pop %v922
    %v924 = vmul.f32 1.0, %v923
    %v925 = vtanh.pop %v911
    %927 = vrot.lane.b32.xlu0 %v834, 32
    %v928 = vpop.permute.xlu0 %927
    %v930 = vmul.f32 %v917, %v928
    %932 = vrot.lane.b32.xlu0 %v918, 32
    %v933 = vpop.permute.xlu0 %932
    %v935 = vmul.f32 %v917, %v933
    %937 = vrot.lane.b32.xlu0 %v935, 32
    %v938 = vpop.permute.xlu0 %937
    %v940 = vadd.f32 %v930, %v938
    %v941 = vtanh.pop %v940
    %943 = vrot.lane.b32.xlu0 %v941, 32
    %v944 = vpop.permute.xlu0 %943
    %v946 = vmul.f32 %v917, %v944
    %v947 = vmul.f32 %v924, %v834
    %949 = vrot.lane.b32.xlu0 %v925, 32
    %v950 = vpop.permute.xlu0 %949
    %v952 = vmul.f32 %v924, %v950
    %954 = vrot.lane.b32.xlu0 %v952, 32
    %v955 = vpop.permute.xlu0 %954
    %v957 = vadd.f32 %v947, %v955
    %v958 = vtanh.pop %v957
    %960 = vrot.lane.b32.xlu0 %v958, 32
    %v961 = vpop.permute.xlu0 %960
    %v963 = vmul.f32 %v924, %v961
    %965 = vrot.lane.b32.xlu0 %v946, 64
    %v966 = vpop.permute.xlu0 %965
    %969 = vrot.lane.b32.xlu0 %v963, 96
    %v970 = vpop.permute.xlu0 %969
    %v972 = vsel %vm369, %v966, %v970
    %974 = vrot.lane.b32.xlu0 %v940, 96
    %v975 = vpop.permute.xlu0 %974
    %v977 = vsel %vm369, %v975, %v957
    %v978 = vadd.f32 %v835, %v972
    %v980 = vsel %vm236, %v972, 0
    %982 = vmatprep.subr.mxu0 0.0
    %983 = vmatpush1.msra.mxu0 0.0
    %984 = vmatprep.subr.mxu0 0.0
    %985 = vmatpush1.msra.mxu0 0.0
    %986 = vmatprep.subr.mxu0 0.0
    %987 = vmatpush1.msra.mxu0 0.0
    %988 = vmatprep.subr.mxu0 0.0
    %989 = vmatpush1.msra.mxu0 0.0
    %990 = vmatprep.subr.mxu0 0.0
    %991 = vmatpush1.msra.mxu0 0.0
    %992 = vmatprep.subr.mxu0 0.0
    %993 = vmatpush1.msra.mxu0 0.0
    %994 = vmatprep.subr.mxu0 0.0
    %995 = vmatpush1.msra.mxu0 0.0
    %996 = vmatprep.subr.mxu0 0.0
    %997 = vmatpush1.msra.mxu0 0.0
    %998 = vmatprep.subr.mxu0 %v225
    %999 = vmatpush1.msra.mxu0 %v224
    %1000 = vmatprep.subr.mxu0 %v223
    %1001 = vmatpush1.msra.mxu0 %v222
    %1002 = vmatprep.subr.mxu0 %v221
    %1003 = vmatpush1.msra.mxu0 %v220
    %1004 = vmatprep.subr.mxu0 %v219
    %1005 = vmatpush1.msra.mxu0 %v218
    %1006 = vmatprep.subr.mxu0 %v217
    %1007 = vmatpush1.msra.mxu0 %v216
    %1008 = vmatprep.subr.mxu0 %v215
    %1009 = vmatpush1.msra.mxu0 %v214
    %1010 = vmatprep.subr.mxu0 %v213
    %1011 = vmatpush1.msra.mxu0 %v212
    %1012 = vmatprep.subr.mxu0 %v211
    %1013 = vmatpush1.msra.mxu0 %v210
    %1014 = vmatprep.subr.mxu0 0.0
    %1015 = vmatpush2.msra.mxu0 0.0
    %1016 = vmatprep.subr.mxu0 0.0
    %1017 = vmatpush2.msra.mxu0 0.0
    %1018 = vmatprep.subr.mxu0 0.0
    %1019 = vmatpush2.msra.mxu0 0.0
    %1020 = vmatprep.subr.mxu0 0.0
    %1021 = vmatpush2.msra.mxu0 0.0
    %1022 = vmatprep.subr.mxu0 0.0
    %1023 = vmatpush2.msra.mxu0 0.0
    %1024 = vmatprep.subr.mxu0 0.0
    %1025 = vmatpush2.msra.mxu0 0.0
    %1026 = vmatprep.subr.mxu0 0.0
    %1027 = vmatpush2.msra.mxu0 0.0
    %1028 = vmatprep.subr.mxu0 0.0
    %1029 = vmatpush2.msra.mxu0 0.0
    %1030 = vmatprep.subr.mxu0 0.0
    %1031 = vmatpush2.msra.mxu0 0.0
    %1032 = vmatprep.subr.mxu0 0.0
    %1033 = vmatpush2.msra.mxu0 0.0
    %1034 = vmatprep.subr.mxu0 0.0
    %1035 = vmatpush2.msra.mxu0 0.0
    %1036 = vmatprep.subr.mxu0 0.0
    %1037 = vmatpush2.msra.mxu0 0.0
    %1038 = vmatprep.subr.mxu0 0.0
    %1039 = vmatpush2.msra.mxu0 0.0
    %1040 = vmatprep.subr.mxu0 0.0
    %1041 = vmatpush2.msra.mxu0 0.0
    %1042 = vmatprep.subr.mxu0 0.0
    %1043 = vmatpush2.msra.mxu0 0.0
    %1044 = vmatprep.subr.mxu0 0.0
    %1045 = vmatpush2.msra.mxu0 0.0
    %1046 = vmatprep.mubr.f32.mxu0 0.0
    %1047 = vmatmul.mubr.f32.gmra.mxu0 %v980
    %v1048 = vpop.f32.mrf.mxu0
    %v1049 = vadd.f32 0.0, %v1048
    %v1050 = vpop.f32.mrf.mxu0
    %v1051 = vadd.f32 0.0, %v1050
    %1052 = vdwg.mxu0
    %v1053 = vadd.f32 %v538, %v1049
    %v1054 = vadd.f32 %v534, %v1051
    %v1055 = vxor.u32 %v1053, 2147483648
    %v1056 = vmul.f32 %v1055, 1.442695
    %v1057 = vpow.pop %v1056
    %v1058 = vadd.f32 %v1057, 1.0
    %v1059 = vrcp.pop %v1058
    %v1060 = vmul.f32 1.0, %v1059
    %v1061 = vtanh.pop %v1053
    %v1062 = vxor.u32 %v1054, 2147483648
    %v1063 = vmul.f32 %v1062, 1.442695
    %v1064 = vpow.pop %v1063
    %v1065 = vadd.f32 %v1064, 1.0
    %v1066 = vrcp.pop %v1065
    %v1067 = vmul.f32 1.0, %v1066
    %v1068 = vtanh.pop %v1054
    %1070 = vrot.lane.b32.xlu0 %v977, 32
    %v1071 = vpop.permute.xlu0 %1070
    %v1073 = vmul.f32 %v1060, %v1071
    %1075 = vrot.lane.b32.xlu0 %v1061, 32
    %v1076 = vpop.permute.xlu0 %1075
    %v1078 = vmul.f32 %v1060, %v1076
    %1080 = vrot.lane.b32.xlu0 %v1078, 32
    %v1081 = vpop.permute.xlu0 %1080
    %v1083 = vadd.f32 %v1073, %v1081
    %v1084 = vtanh.pop %v1083
    %1086 = vrot.lane.b32.xlu0 %v1084, 32
    %v1087 = vpop.permute.xlu0 %1086
    %v1089 = vmul.f32 %v1060, %v1087
    %v1090 = vmul.f32 %v1067, %v977
    %1092 = vrot.lane.b32.xlu0 %v1068, 32
    %v1093 = vpop.permute.xlu0 %1092
    %v1095 = vmul.f32 %v1067, %v1093
    %1097 = vrot.lane.b32.xlu0 %v1095, 32
    %v1098 = vpop.permute.xlu0 %1097
    %v1100 = vadd.f32 %v1090, %v1098
    %v1101 = vtanh.pop %v1100
    %1103 = vrot.lane.b32.xlu0 %v1101, 32
    %v1104 = vpop.permute.xlu0 %1103
    %v1106 = vmul.f32 %v1067, %v1104
    %1108 = vrot.lane.b32.xlu0 %v1089, 64
    %v1109 = vpop.permute.xlu0 %1108
    %1112 = vrot.lane.b32.xlu0 %v1106, 96
    %v1113 = vpop.permute.xlu0 %1112
    %v1115 = vsel %vm369, %v1109, %v1113
    %1117 = vrot.lane.b32.xlu0 %v1083, 96
    %v1118 = vpop.permute.xlu0 %1117
    %v1120 = vsel %vm369, %v1118, %v1100
    %v1121 = vadd.f32 %v978, %v1115
    %v1123 = vsel %vm236, %v1115, 0
    %1125 = vmatprep.subr.mxu0 0.0
    %1126 = vmatpush1.msra.mxu0 0.0
    %1127 = vmatprep.subr.mxu0 0.0
    %1128 = vmatpush1.msra.mxu0 0.0
    %1129 = vmatprep.subr.mxu0 0.0
    %1130 = vmatpush1.msra.mxu0 0.0
    %1131 = vmatprep.subr.mxu0 0.0
    %1132 = vmatpush1.msra.mxu0 0.0
    %1133 = vmatprep.subr.mxu0 0.0
    %1134 = vmatpush1.msra.mxu0 0.0
    %1135 = vmatprep.subr.mxu0 0.0
    %1136 = vmatpush1.msra.mxu0 0.0
    %1137 = vmatprep.subr.mxu0 0.0
    %1138 = vmatpush1.msra.mxu0 0.0
    %1139 = vmatprep.subr.mxu0 0.0
    %1140 = vmatpush1.msra.mxu0 0.0
    %1141 = vmatprep.subr.mxu0 %v225
    %1142 = vmatpush1.msra.mxu0 %v224
    %1143 = vmatprep.subr.mxu0 %v223
    %1144 = vmatpush1.msra.mxu0 %v222
    %1145 = vmatprep.subr.mxu0 %v221
    %1146 = vmatpush1.msra.mxu0 %v220
    %1147 = vmatprep.subr.mxu0 %v219
    %1148 = vmatpush1.msra.mxu0 %v218
    %1149 = vmatprep.subr.mxu0 %v217
    %1150 = vmatpush1.msra.mxu0 %v216
    %1151 = vmatprep.subr.mxu0 %v215
    %1152 = vmatpush1.msra.mxu0 %v214
    %1153 = vmatprep.subr.mxu0 %v213
    %1154 = vmatpush1.msra.mxu0 %v212
    %1155 = vmatprep.subr.mxu0 %v211
    %1156 = vmatpush1.msra.mxu0 %v210
    %1157 = vmatprep.subr.mxu0 0.0
    %1158 = vmatpush2.msra.mxu0 0.0
    %1159 = vmatprep.subr.mxu0 0.0
    %1160 = vmatpush2.msra.mxu0 0.0
    %1161 = vmatprep.subr.mxu0 0.0
    %1162 = vmatpush2.msra.mxu0 0.0
    %1163 = vmatprep.subr.mxu0 0.0
    %1164 = vmatpush2.msra.mxu0 0.0
    %1165 = vmatprep.subr.mxu0 0.0
    %1166 = vmatpush2.msra.mxu0 0.0
    %1167 = vmatprep.subr.mxu0 0.0
    %1168 = vmatpush2.msra.mxu0 0.0
    %1169 = vmatprep.subr.mxu0 0.0
    %1170 = vmatpush2.msra.mxu0 0.0
    %1171 = vmatprep.subr.mxu0 0.0
    %1172 = vmatpush2.msra.mxu0 0.0
    %1173 = vmatprep.subr.mxu0 0.0
    %1174 = vmatpush2.msra.mxu0 0.0
    %1175 = vmatprep.subr.mxu0 0.0
    %1176 = vmatpush2.msra.mxu0 0.0
    %1177 = vmatprep.subr.mxu0 0.0
    %1178 = vmatpush2.msra.mxu0 0.0
    %1179 = vmatprep.subr.mxu0 0.0
    %1180 = vmatpush2.msra.mxu0 0.0
    %1181 = vmatprep.subr.mxu0 0.0
    %1182 = vmatpush2.msra.mxu0 0.0
    %1183 = vmatprep.subr.mxu0 0.0
    %1184 = vmatpush2.msra.mxu0 0.0
    %1185 = vmatprep.subr.mxu0 0.0
    %1186 = vmatpush2.msra.mxu0 0.0
    %1187 = vmatprep.subr.mxu0 0.0
    %1188 = vmatpush2.msra.mxu0 0.0
    %1189 = vmatprep.mubr.f32.mxu0 0.0
    %1190 = vmatmul.mubr.f32.gmra.mxu0 %v1123
    %v1191 = vpop.f32.mrf.mxu0
    %v1192 = vadd.f32 0.0, %v1191
    %v1193 = vpop.f32.mrf.mxu0
    %v1194 = vadd.f32 0.0, %v1193
    %1195 = vdwg.mxu0
    %v1196 = vadd.f32 %v385, %v1192
    %v1197 = vadd.f32 %v381, %v1194
    %v1198 = vxor.u32 %v1196, 2147483648
    %v1199 = vmul.f32 %v1198, 1.442695
    %v1200 = vpow.pop %v1199
    %v1201 = vadd.f32 %v1200, 1.0
    %v1202 = vrcp.pop %v1201
    %v1203 = vmul.f32 1.0, %v1202
    %v1204 = vtanh.pop %v1196
    %v1205 = vxor.u32 %v1197, 2147483648
    %v1206 = vmul.f32 %v1205, 1.442695
    %v1207 = vpow.pop %v1206
    %v1208 = vadd.f32 %v1207, 1.0
    %v1209 = vrcp.pop %v1208
    %v1210 = vmul.f32 1.0, %v1209
    %v1211 = vtanh.pop %v1197
    %1213 = vrot.lane.b32.xlu0 %v1120, 32
    %v1214 = vpop.permute.xlu0 %1213
    %v1216 = vmul.f32 %v1203, %v1214
    %1218 = vrot.lane.b32.xlu0 %v1204, 32
    %v1219 = vpop.permute.xlu0 %1218
    %v1221 = vmul.f32 %v1203, %v1219
    %1223 = vrot.lane.b32.xlu0 %v1221, 32
    %v1224 = vpop.permute.xlu0 %1223
    %v1226 = vadd.f32 %v1216, %v1224
    %v1227 = vtanh.pop %v1226
    %1229 = vrot.lane.b32.xlu0 %v1227, 32
    %v1230 = vpop.permute.xlu0 %1229
    %v1232 = vmul.f32 %v1203, %v1230
    %v1233 = vmul.f32 %v1210, %v1120
    %1235 = vrot.lane.b32.xlu0 %v1211, 32
    %v1236 = vpop.permute.xlu0 %1235
    %v1238 = vmul.f32 %v1210, %v1236
    %1240 = vrot.lane.b32.xlu0 %v1238, 32
    %v1241 = vpop.permute.xlu0 %1240
    %v1243 = vadd.f32 %v1233, %v1241
    %v1244 = vtanh.pop %v1243
    %1246 = vrot.lane.b32.xlu0 %v1244, 32
    %v1247 = vpop.permute.xlu0 %1246
    %v1249 = vmul.f32 %v1210, %v1247
    %1251 = vrot.lane.b32.xlu0 %v1232, 64
    %v1252 = vpop.permute.xlu0 %1251
    %1255 = vrot.lane.b32.xlu0 %v1249, 96
    %v1256 = vpop.permute.xlu0 %1255
    %v1258 = vsel %vm369, %v1252, %v1256
    %1260 = vrot.lane.b32.xlu0 %v1226, 96
    %v1261 = vpop.permute.xlu0 %1260
    %v1263 = vsel %vm369, %v1261, %v1243
    %v1264 = vadd.f32 %v1121, %v1258
    %v1266 = vsel %vm236, %v1258, 0
    %1268 = vmatprep.subr.mxu0 0.0
    %1269 = vmatpush1.msra.mxu0 0.0
    %1270 = vmatprep.subr.mxu0 0.0
    %1271 = vmatpush1.msra.mxu0 0.0
    %1272 = vmatprep.subr.mxu0 0.0
    %1273 = vmatpush1.msra.mxu0 0.0
    %1274 = vmatprep.subr.mxu0 0.0
    %1275 = vmatpush1.msra.mxu0 0.0
    %1276 = vmatprep.subr.mxu0 0.0
    %1277 = vmatpush1.msra.mxu0 0.0
    %1278 = vmatprep.subr.mxu0 0.0
    %1279 = vmatpush1.msra.mxu0 0.0
    %1280 = vmatprep.subr.mxu0 0.0
    %1281 = vmatpush1.msra.mxu0 0.0
    %1282 = vmatprep.subr.mxu0 0.0
    %1283 = vmatpush1.msra.mxu0 0.0
    %1284 = vmatprep.subr.mxu0 %v225
    %1285 = vmatpush1.msra.mxu0 %v224
    %1286 = vmatprep.subr.mxu0 %v223
    %1287 = vmatpush1.msra.mxu0 %v222
    %1288 = vmatprep.subr.mxu0 %v221
    %1289 = vmatpush1.msra.mxu0 %v220
    %1290 = vmatprep.subr.mxu0 %v219
    %1291 = vmatpush1.msra.mxu0 %v218
    %1292 = vmatprep.subr.mxu0 %v217
    %1293 = vmatpush1.msra.mxu0 %v216
    %1294 = vmatprep.subr.mxu0 %v215
    %1295 = vmatpush1.msra.mxu0 %v214
    %1296 = vmatprep.subr.mxu0 %v213
    %1297 = vmatpush1.msra.mxu0 %v212
    %1298 = vmatprep.subr.mxu0 %v211
    %1299 = vmatpush1.msra.mxu0 %v210
    %1300 = vmatprep.subr.mxu0 0.0
    %1301 = vmatpush2.msra.mxu0 0.0
    %1302 = vmatprep.subr.mxu0 0.0
    %1303 = vmatpush2.msra.mxu0 0.0
    %1304 = vmatprep.subr.mxu0 0.0
    %1305 = vmatpush2.msra.mxu0 0.0
    %1306 = vmatprep.subr.mxu0 0.0
    %1307 = vmatpush2.msra.mxu0 0.0
    %1308 = vmatprep.subr.mxu0 0.0
    %1309 = vmatpush2.msra.mxu0 0.0
    %1310 = vmatprep.subr.mxu0 0.0
    %1311 = vmatpush2.msra.mxu0 0.0
    %1312 = vmatprep.subr.mxu0 0.0
    %1313 = vmatpush2.msra.mxu0 0.0
    %1314 = vmatprep.subr.mxu0 0.0
    %1315 = vmatpush2.msra.mxu0 0.0
    %1316 = vmatprep.subr.mxu0 0.0
    %1317 = vmatpush2.msra.mxu0 0.0
    %1318 = vmatprep.subr.mxu0 0.0
    %1319 = vmatpush2.msra.mxu0 0.0
    %1320 = vmatprep.subr.mxu0 0.0
    %1321 = vmatpush2.msra.mxu0 0.0
    %1322 = vmatprep.subr.mxu0 0.0
    %1323 = vmatpush2.msra.mxu0 0.0
    %1324 = vmatprep.subr.mxu0 0.0
    %1325 = vmatpush2.msra.mxu0 0.0
    %1326 = vmatprep.subr.mxu0 0.0
    %1327 = vmatpush2.msra.mxu0 0.0
    %1328 = vmatprep.subr.mxu0 0.0
    %1329 = vmatpush2.msra.mxu0 0.0
    %1330 = vmatprep.subr.mxu0 0.0
    %1331 = vmatpush2.msra.mxu0 0.0
    %1332 = vmatprep.mubr.f32.mxu0 0.0
    %1333 = vmatmul.mubr.f32.gmra.mxu0 %v1266
    %v1334 = vpop.f32.mrf.mxu0
    %v1335 = vadd.f32 0.0, %v1334
    %v1336 = vpop.f32.mrf.mxu0
    %v1337 = vadd.f32 0.0, %v1336
    %1338 = vdwg.mxu0
    %v1339 = vadd.f32 %v234, %v1335
    %v1340 = vadd.f32 %v230, %v1337
    %v1341 = vxor.u32 %v1339, 2147483648
    %v1342 = vmul.f32 %v1341, 1.442695
    %v1343 = vpow.pop %v1342
    %v1344 = vadd.f32 %v1343, 1.0
    %v1345 = vrcp.pop %v1344
    %v1346 = vmul.f32 1.0, %v1345
    %v1347 = vtanh.pop %v1339
    %v1348 = vxor.u32 %v1340, 2147483648
    %v1349 = vmul.f32 %v1348, 1.442695
    %v1350 = vpow.pop %v1349
    %v1351 = vadd.f32 %v1350, 1.0
    %v1352 = vrcp.pop %v1351
    %v1353 = vmul.f32 1.0, %v1352
    %v1354 = vtanh.pop %v1340
    %1356 = vrot.lane.b32.xlu0 %v1263, 32
    %v1357 = vpop.permute.xlu0 %1356
    %v1359 = vmul.f32 %v1346, %v1357
    %1361 = vrot.lane.b32.xlu0 %v1347, 32
    %v1362 = vpop.permute.xlu0 %1361
    %v1364 = vmul.f32 %v1346, %v1362
    %1366 = vrot.lane.b32.xlu0 %v1364, 32
    %v1367 = vpop.permute.xlu0 %1366
    %v1369 = vadd.f32 %v1359, %v1367
    %v1370 = vtanh.pop %v1369
    %1372 = vrot.lane.b32.xlu0 %v1370, 32
    %v1373 = vpop.permute.xlu0 %1372
    %v1375 = vmul.f32 %v1346, %v1373
    %v1376 = vmul.f32 %v1353, %v1263
    %1378 = vrot.lane.b32.xlu0 %v1354, 32
    %v1379 = vpop.permute.xlu0 %1378
    %v1381 = vmul.f32 %v1353, %v1379
    %1383 = vrot.lane.b32.xlu0 %v1381, 32
    %v1384 = vpop.permute.xlu0 %1383
    %v1386 = vadd.f32 %v1376, %v1384
    %v1387 = vtanh.pop %v1386
    %1389 = vrot.lane.b32.xlu0 %v1387, 32
    %v1390 = vpop.permute.xlu0 %1389
    %v1392 = vmul.f32 %v1353, %v1390
    %1394 = vrot.lane.b32.xlu0 %v1375, 64
    %v1395 = vpop.permute.xlu0 %1394
    %1398 = vrot.lane.b32.xlu0 %v1392, 96
    %v1399 = vpop.permute.xlu0 %1398
    %v1401 = vsel %vm369, %v1395, %v1399
    %v1402 = vadd.f32 %v1264, %v1401
    %v1403 = vlaneseq
    %v1404 = vshrl.u32 %v1403, 7
    %vm1405 = vcmp.lt.s32.totalorder %v1404, 2
    %v1406 = vsel %vm1405, 1, 0
    %v1407 = vcvt.s32.f32 %v1406
    %v1408 = vmul.f32 %v1402, %v1407
    %v1409 = vsel %vm236, %v1408, 0.0
    %v1410 = vrot.slane %v1409, 4
    %v1411 = vadd.f32 %v1409, %v1410
    %v1412 = vrot.slane %v1411, 2
    %v1413 = vadd.f32 %v1411, %v1412
    %v1414 = vrot.slane %v1413, 1
    %v1415 = vadd.f32 %v1413, %v1414
    %v1416 = vmul.f32 %v1415, 0.0625
    %vm1417 = vcmask 516096
    %1418 = vst.msk [vmem:[#allocation6] sm:$0x1] %vm1417, %v1416
    // Predicated region
    $region22: #{tpu_custom_call.1} parent=1 // pred_check
      _
    $region23: #{tpu_custom_call.1} parent=1 // pred_check_branch
      %1420 = sbr.rel (0) target = $region25
    $region24: #{tpu_custom_call.1} parent=1 // pred_region
      %s1422 = ssub.s32 16, 16
      %1423 = vsyncadd [#allocation5], %s1422
      %s1425 = sshll.u32 [#allocation6], 4
      %s1426 = int_to_ptr.vmem [resolvable:$true] %s1425
      %1428 = dma.vmem_to_hbm [thread:$0]  %s1426, 16, %s4, [#allocation5]
    $region25: #{tpu_custom_call.1} parent=1 // pred_fallthru
      _
    // Predicated region
    $region26: #{tpu_custom_call.1} parent=1 // pred_check
      _
    $region27: #{tpu_custom_call.1} parent=1 // pred_check_branch
      %1430 = sbr.rel (0) target = $region29
    $region28: #{tpu_custom_call.1} parent=1 // pred_region
      %1431 = dma.done [#allocation5], 16
    $region29: #{tpu_custom_call.1} parent=1 // pred_fallthru
      _
    %1432 = vsyncpa [#allocation4], 1
    %1433 = vsyncpa [#allocation5], 1

</llo_original>
